<compile_context>
chip_gen: v6e
topology: v6e:2x2x1
jax: 0.10.0
libtpu: 0.0.40
codegen_flags: <defaults>
</compile_context>

<pallas_src>
import jax
import jax.numpy as jnp
from jax.experimental import pallas as pl
from jax.experimental.pallas import tpu as pltpu


# ----------------------------------------------------------------------------
# Fused GCNConv kernel: one output-channel tile per grid step.
# ----------------------------------------------------------------------------
def _gcn_kernel(srcT_ref, dst_ref, x_ref, wt_ref, b_ref, o_ref):
    n = x_ref.shape[0]
    e = dst_ref.shape[1]

    # ---- dense normalized adjacency  A_hat = D^-1/2 (A_offdiag + I) D^-1/2 -----
    # One-hot incidence built with iota compares (VPU), contracted on the MXU.
    # src one-hot is built directly in (E, N) layout -> plain MXU matmul, no XLU
    # transpose.  bf16 operands are exact for 0/1 one-hots; accumulate in f32.
    onehot_dst = (jax.lax.broadcasted_iota(jnp.int32, (n, e), 0)
                  == dst_ref[...]).astype(jnp.bfloat16)               # (N, E)
    onehot_srcT = (jax.lax.broadcasted_iota(jnp.int32, (e, n), 1)
                   == srcT_ref[...]).astype(jnp.bfloat16)             # (E, N)
    adj = jnp.dot(onehot_dst, onehot_srcT,
                  preferred_element_type=jnp.float32)                 # (N, N) counts

    # add_remaining_self_loops with unit edge weights: force diagonal to exactly 1.
    row_i = jax.lax.broadcasted_iota(jnp.int32, (n, n), 0)
    col_i = jax.lax.broadcasted_iota(jnp.int32, (n, n), 1)
    adj = jnp.where(row_i == col_i, jnp.float32(1.0), adj)            # f32 VPU select

    deg = jnp.sum(adj, axis=1, keepdims=True)                         # (N, 1), >= 1
    dinv = jax.lax.rsqrt(deg)                                         # EUP slot, f32

    # ---- fused linear + normalized aggregation for this output tile ------------
    xw = jnp.dot(x_ref[...], wt_ref[...],
                 preferred_element_type=jnp.float32)                  # bf16 MXU -> f32
    scaled = (xw * dinv).astype(jnp.bfloat16)                         # row-scale, f32
    agg = jnp.dot(adj.astype(jnp.bfloat16), scaled,
                  preferred_element_type=jnp.float32)                 # (N, TN)
    o_ref[...] = (agg * dinv + b_ref[...]).astype(o_ref.dtype)        # f32 epilogue


# ----------------------------------------------------------------------------
# Device-adaptive output-channel tiling:
#   v7x (2 TensorCores/chip) -> 2-way parallel split; v5e / v6e -> single tile.
# ----------------------------------------------------------------------------
def _default_tile_out(f_out):
    try:
        kind = jax.devices()[0].device_kind.lower()
    except Exception:
        kind = ""
    if ("v7" in kind or "7x" in kind) and f_out % 256 == 0 and f_out >= 512:
        return 256
    return f_out


# ----------------------------------------------------------------------------
# Wrapper: single fused pallas_call.
# ----------------------------------------------------------------------------
def gcn_conv_forward(x, edge_index, weight_t, bias, *, tile_out=None):
    n, f_in = x.shape
    f_out = weight_t.shape[1]
    e = edge_index.shape[1]
    if tile_out is None:
        tile_out = _default_tile_out(f_out)
    assert f_out % tile_out == 0

    srcT = edge_index[0, :].reshape(e, 1).astype(jnp.int32)     # (E, 1) column
    dst = edge_index[1:2, :].astype(jnp.int32)                  # (1, E) row
    x_bf = x.astype(jnp.bfloat16)                               # bf16 MXU operand
    wt_bf = weight_t.astype(jnp.bfloat16)                       # bf16 MXU operand
    b2d = bias.reshape(1, f_out).astype(jnp.float32)            # f32 epilogue

    grid = (f_out // tile_out,)

    # Advisory cost hint so XLA schedules neighbouring HLO around this small call.
    flops = 2 * n * e * n + 2 * n * f_in * f_out + 2 * n * n * f_out
    bytes_accessed = (x_bf.size * 2 + wt_bf.size * 2 + b2d.size * 4
                      + 2 * e * 4 + n * f_out * 4)
    cost = pl.CostEstimate(flops=int(flops), transcendentals=int(n),
                           bytes_accessed=int(bytes_accessed))

    return pl.pallas_call(
        _gcn_kernel,
        out_shape=jax.ShapeDtypeStruct((n, f_out), jnp.float32),
        grid_spec=pltpu.PrefetchScalarGridSpec(
            num_scalar_prefetch=0,
            grid=grid,
            in_specs=[
                pl.BlockSpec((e, 1), lambda j: (0, 0)),                # src ids (E,1)
                pl.BlockSpec((1, e), lambda j: (0, 0)),                # dst ids (1,E)
                pl.BlockSpec((n, f_in), lambda j: (0, 0)),             # x (bf16)
                pl.BlockSpec((f_in, tile_out), lambda j: (0, j)),      # W^T tile (bf16)
                pl.BlockSpec((1, tile_out), lambda j: (0, j)),         # bias tile (f32)
            ],
            out_specs=pl.BlockSpec((n, tile_out), lambda j: (0, j)),   # lane-dense out
        ),
        compiler_params=pltpu.CompilerParams(
            dimension_semantics=("parallel",)),
        cost_estimate=cost,
    )(srcT, dst, x_bf, wt_bf, b2d)


# ----------------------------------------------------------------------------
# Pure-JAX f32 reference (same GCNConv semantics) for a correctness check.
# ----------------------------------------------------------------------------
def _gcn_reference(x, edge_index, weight_t, bias):
    n = x.shape[0]
    src, dst = edge_index[0], edge_index[1]
    adj = jnp.zeros((n, n), jnp.float32).at[dst, src].add(1.0)
    eye = jnp.eye(n, dtype=jnp.float32)
    adj = adj * (1.0 - eye) + eye
    deg = adj.sum(axis=1, keepdims=True)
    dinv = 1.0 / jnp.sqrt(deg)
    xw = x.astype(jnp.float32) @ weight_t.astype(jnp.float32)
    return dinv * (adj @ (dinv * xw)) + bias.reshape(1, -1)


if __name__ == "__main__":
    # Small graph; channel dims fixed at 512 by the module (GCNConv(512, 512)).
    N, E = 64, 128
    IN_CH = OUT_CH = 512

    key = jax.random.PRNGKey(0)
    k_x, k_e, k_w, k_b = jax.random.split(key, 4)

    x = jax.random.normal(k_x, (N, IN_CH), dtype=jnp.float32)
    edge_index = jax.random.randint(k_e, (2, E), 0, N, dtype=jnp.int32)
    # GCNConv linear weight stored pre-transposed: (in_channels, out_channels).
    weight_t = (0.05 * jax.random.normal(k_w, (IN_CH, OUT_CH))).astype(jnp.float32)
    bias = (0.01 * jax.random.normal(k_b, (OUT_CH,))).astype(jnp.float32)

    out = gcn_conv_forward(x, edge_index, weight_t, bias)
    out = jax.block_until_ready(out)

    assert out.shape == (N, OUT_CH)
    assert bool(jnp.all(jnp.isfinite(out)))

    ref = _gcn_reference(x, edge_index, weight_t, bias)
    assert bool(jnp.allclose(out, ref, atol=5e-2, rtol=5e-2)), \
        float(jnp.max(jnp.abs(out - ref)))

    print("KERNEL_OK")
</pallas_src>

<mosaic_0001>
module attributes {stable_mosaic.version = 11 : i64} {
  func.func @_gcn_kernel(%arg0: i32, %arg1: memref<128x1xi32, #tpu.memory_space<vmem>>, %arg2: memref<1x128xi32, #tpu.memory_space<vmem>>, %arg3: memref<64x512xbf16, #tpu.memory_space<vmem>>, %arg4: memref<512x512xbf16, #tpu.memory_space<vmem>>, %arg5: memref<1x512xf32, #tpu.memory_space<vmem>>, %arg6: memref<64x512xf32, #tpu.memory_space<vmem>>) attributes {dimension_semantics = [#tpu.dimension_semantics<parallel>], iteration_bounds = array<i64: 1>, scalar_prefetch = 0 : i64, scratch_operands = 0 : i64, tpu.core_type = #tpu.core_type<tc>, window_params = [{pipeline_mode = #tpu.pipeline_mode<synchronous>, transform_indices = @transform_0, window_bounds = array<i64: 128, 1>}, {pipeline_mode = #tpu.pipeline_mode<synchronous>, transform_indices = @transform_1, window_bounds = array<i64: 1, 128>}, {pipeline_mode = #tpu.pipeline_mode<synchronous>, transform_indices = @transform_2, window_bounds = array<i64: 64, 512>}, {transform_indices = @transform_3, window_bounds = array<i64: 512, 512>}, {transform_indices = @transform_4, window_bounds = array<i64: 1, 512>}, {transform_indices = @transform_5, window_bounds = array<i64: 64, 512>}]} {
    %0 = tpu.iota {dimensions = array<i32: 0>} : vector<64x128xi32>
    %c0 = arith.constant 0 : index
    %c0_0 = arith.constant 0 : index
    %1 = vector.load %arg2[%c0, %c0_0] : memref<1x128xi32, #tpu.memory_space<vmem>>, vector<1x128xi32>
    %2 = vector.broadcast %1 : vector<1x128xi32> to vector<64x128xi32>
    %3 = arith.cmpi eq, %0, %2 : vector<64x128xi32>
    %4 = arith.extui %3 : vector<64x128xi1> to vector<64x128xi32>
    %5 = arith.sitofp %4 : vector<64x128xi32> to vector<64x128xf32>
    %6 = arith.truncf %5 : vector<64x128xf32> to vector<64x128xbf16>
    %7 = tpu.iota {dimensions = array<i32: 1>} : vector<128x64xi32>
    %c0_1 = arith.constant 0 : index
    %c0_2 = arith.constant 0 : index
    %8 = vector.load %arg1[%c0_1, %c0_2] : memref<128x1xi32, #tpu.memory_space<vmem>>, vector<128x1xi32>
    %9 = vector.broadcast %8 : vector<128x1xi32> to vector<128x64xi32>
    %10 = arith.cmpi eq, %7, %9 : vector<128x64xi32>
    %11 = arith.extui %10 : vector<128x64xi1> to vector<128x64xi32>
    %12 = arith.sitofp %11 : vector<128x64xi32> to vector<128x64xf32>
    %13 = arith.truncf %12 : vector<128x64xf32> to vector<128x64xbf16>
    %cst = arith.constant dense<0.000000e+00> : vector<64x64xf32>
    %14 = tpu.matmul %6, %13, %cst {dimension_numbers = #tpu.dot_dimension_numbers<[1], [0], [0], [1], [0, 0, 1, 1], [], []>} : vector<64x128xbf16>, vector<128x64xbf16>, vector<64x64xf32> -> vector<64x64xf32>
    %15 = tpu.iota {dimensions = array<i32: 0>} : vector<64x64xi32>
    %16 = tpu.iota {dimensions = array<i32: 1>} : vector<64x64xi32>
    %17 = arith.cmpi eq, %15, %16 : vector<64x64xi32>
    %cst_3 = arith.constant 1.000000e+00 : f32
    %18 = vector.broadcast %cst_3 : f32 to vector<64x64xf32>
    %19 = arith.select %17, %18, %14 : vector<64x64xi1>, vector<64x64xf32>
    %cst_4 = arith.constant dense<0.000000e+00> : vector<64xf32>
    %20 = vector.multi_reduction <add>, %19, %cst_4 [1] : vector<64x64xf32> to vector<64xf32>
    %21 = vector.shape_cast %20 : vector<64xf32> to vector<64x1xf32>
    %22 = math.rsqrt %21 : vector<64x1xf32>
    %c0_5 = arith.constant 0 : index
    %c0_6 = arith.constant 0 : index
    %23 = vector.load %arg3[%c0_5, %c0_6] : memref<64x512xbf16, #tpu.memory_space<vmem>>, vector<64x512xbf16>
    %c0_7 = arith.constant 0 : index
    %c0_8 = arith.constant 0 : index
    %24 = vector.load %arg4[%c0_7, %c0_8] : memref<512x512xbf16, #tpu.memory_space<vmem>>, vector<512x512xbf16>
    %cst_9 = arith.constant dense<0.000000e+00> : vector<64x512xf32>
    %25 = tpu.matmul %23, %24, %cst_9 {dimension_numbers = #tpu.dot_dimension_numbers<[1], [0], [0], [1], [0, 0, 1, 1], [], []>} : vector<64x512xbf16>, vector<512x512xbf16>, vector<64x512xf32> -> vector<64x512xf32>
    %26 = vector.broadcast %22 : vector<64x1xf32> to vector<64x512xf32>
    %27 = arith.mulf %25, %26 : vector<64x512xf32>
    %28 = arith.truncf %27 : vector<64x512xf32> to vector<64x512xbf16>
    %29 = arith.truncf %19 : vector<64x64xf32> to vector<64x64xbf16>
    %cst_10 = arith.constant dense<0.000000e+00> : vector<64x512xf32>
    %30 = tpu.matmul %29, %28, %cst_10 {dimension_numbers = #tpu.dot_dimension_numbers<[1], [0], [0], [1], [0, 0, 1, 1], [], []>} : vector<64x64xbf16>, vector<64x512xbf16>, vector<64x512xf32> -> vector<64x512xf32>
    %31 = vector.broadcast %22 : vector<64x1xf32> to vector<64x512xf32>
    %32 = arith.mulf %30, %31 : vector<64x512xf32>
    %c0_11 = arith.constant 0 : index
    %c0_12 = arith.constant 0 : index
    %33 = vector.load %arg5[%c0_11, %c0_12] : memref<1x512xf32, #tpu.memory_space<vmem>>, vector<1x512xf32>
    %34 = vector.broadcast %33 : vector<1x512xf32> to vector<64x512xf32>
    %35 = arith.addf %32, %34 : vector<64x512xf32>
    %c0_13 = arith.constant 0 : index
    %c0_14 = arith.constant 0 : index
    %36 = vector.load %arg6[%c0_13, %c0_14] : memref<64x512xf32, #tpu.memory_space<vmem>>, vector<64x512xf32>
    tpu.vector_store %arg6[%c0_13, %c0_14], %35 {strides = array<i32>} : memref<64x512xf32, #tpu.memory_space<vmem>>, vector<64x512xf32>,
    return
  }
  func.func @transform_0(%arg0: i32) -> (i32, i32) {
    %c0_i32 = arith.constant 0 : i32
    %c0_i32_0 = arith.constant 0 : i32
    %c0_i32_1 = arith.constant 0 : i32
    return %c0_i32, %c0_i32_0 : i32, i32
  }
  func.func @transform_1(%arg0: i32) -> (i32, i32) {
    %c0_i32 = arith.constant 0 : i32
    %c0_i32_0 = arith.constant 0 : i32
    %c0_i32_1 = arith.constant 0 : i32
    return %c0_i32, %c0_i32_0 : i32, i32
  }
  func.func @transform_2(%arg0: i32) -> (i32, i32) {
    %c0_i32 = arith.constant 0 : i32
    %c0_i32_0 = arith.constant 0 : i32
    %c0_i32_1 = arith.constant 0 : i32
    return %c0_i32, %c0_i32_0 : i32, i32
  }
  func.func @transform_3(%arg0: i32) -> (i32, i32) {
    %c0_i32 = arith.constant 0 : i32
    %c0_i32_0 = arith.constant 0 : i32
    return %c0_i32, %arg0 : i32, i32
  }
  func.func @transform_4(%arg0: i32) -> (i32, i32) {
    %c0_i32 = arith.constant 0 : i32
    %c0_i32_0 = arith.constant 0 : i32
    return %c0_i32, %arg0 : i32, i32
  }
  func.func @transform_5(%arg0: i32) -> (i32, i32) {
    %c0_i32 = arith.constant 0 : i32
    %c0_i32_0 = arith.constant 0 : i32
    return %c0_i32, %arg0 : i32, i32
  }
}

</mosaic_0001>

<llo_original>
// kernel: tpu_custom_call.1
$region0: #{tpu_custom_call.1}
  #allocation0 [shape = 'u32[]', space=smem, size = 0x4, offset = 0x4, fixed_abs, tag = 'smem constant byte address 0x4 - core index']
  #allocation1 [shape = 'u32[144,128]{1,0:T(1,128)}', space=vmem, size = 0x12000, scoped, tag = 'internal scratch']
  %s0 = inlined_call_operand.vmem [shape: s32[128,1], index: 0, kind: input, shape index: {}]
  %s1 = inlined_call_operand.hbm [shape: s32[1,128], index: 1, kind: input, shape index: {}]
  %s2 = inlined_call_operand.vmem [shape: bf16[64,512], index: 2, kind: input, shape index: {}]
  %s3 = inlined_call_operand.hbm [shape: bf16[512,512], index: 3, kind: input, shape index: {}]
  %s4 = inlined_call_operand.vmem [shape: f32[1,512], index: 4, kind: input, shape index: {}]
  %s5 = inlined_call_operand.hbm [shape: f32[64,512], index: 5, kind: output, shape index: {}]
  %s6 = sld [smem:[#allocation0]]
  $region38: #{tpu_custom_call.1} parent=0
    _
  %s8 = ssub.s32 1, %s6
  %s9 = scalar_select 0, %s8, %s6
  $region1: #{tpu_custom_call.1} parent=0
    #allocation2 [shape = 'u8[512]{0}', space=vmem, size = 0x400, scoped, tag = 'input window, operand 1, single buffered']
    #allocation3 [shape = 's32[1]{0}', space=sflag, size = 0x4, scoped, tag = 'scoped memory for tpu_custom_call.1']
    #allocation4 [shape = 's32[1]{0}', space=sflag, size = 0x4, scoped, tag = 'scoped memory for tpu_custom_call.1']
    #allocation5 [shape = 'u8[524288]{0}', space=vmem, size = 0x80000, scoped, tag = 'input window, operand 3, single buffered']
    #allocation6 [shape = 's32[1]{0}', space=sflag, size = 0x4, scoped, tag = 'scoped memory for tpu_custom_call.1']
    #allocation7 [shape = 'u8[131072]{0}', space=vmem, size = 0x20000, scoped, tag = 'output window, operand 0, single buffered']
    %10 = vsyncpa [#allocation3], 0
    %11 = vsyncpa [#allocation6], 0
    %12 = vsyncpa [#allocation4], 0
    // Predicated region
    $region2: #{tpu_custom_call.1} parent=1 // pred_check
      _
    $region3: #{tpu_custom_call.1} parent=1 // pred_check_branch
      %14 = sbr.rel (0) target = $region5
    $region4: #{tpu_custom_call.1} parent=1 // pred_region
      _
    $region5: #{tpu_custom_call.1} parent=1 // pred_fallthru
      _
    // Predicated region
    $region6: #{tpu_custom_call.1} parent=1 // pred_check
      _
    $region7: #{tpu_custom_call.1} parent=1 // pred_check_branch
      %16 = sbr.rel (0) target = $region9
    $region8: #{tpu_custom_call.1} parent=1 // pred_region
      %s18 = ssub.s32 16, 16
      %19 = vsyncadd [#allocation3], %s18
      %s21 = sshll.u32 [#allocation2], 4
      %s22 = int_to_ptr.vmem [resolvable:$true] %s21
      %24 = dma.hbm_to_vmem [thread:$0]  %s1, 16, %s22, [#allocation3]
    $region9: #{tpu_custom_call.1} parent=1 // pred_fallthru
      _
    // Predicated region
    $region10: #{tpu_custom_call.1} parent=1 // pred_check
      _
    $region11: #{tpu_custom_call.1} parent=1 // pred_check_branch
      %26 = sbr.rel (0) target = $region13
    $region12: #{tpu_custom_call.1} parent=1 // pred_region
      _
    $region13: #{tpu_custom_call.1} parent=1 // pred_fallthru
      _
    // Predicated region
    $region14: #{tpu_custom_call.1} parent=1 // pred_check
      _
    $region15: #{tpu_custom_call.1} parent=1 // pred_check_branch
      %28 = sbr.rel (0) target = $region17
    $region16: #{tpu_custom_call.1} parent=1 // pred_region
      %s30 = ssub.s32 16384, 16384
      %31 = vsyncadd [#allocation6], %s30
      %s32 = sshll.u32 [#allocation5], 4
      %s33 = int_to_ptr.vmem [resolvable:$true] %s32
      %38 = dma.hbm_to_vmem [thread:$0]  %s3, 16384, %s33, [#allocation6], 256, 256, 16
    $region17: #{tpu_custom_call.1} parent=1 // pred_fallthru
      _
    // Predicated region
    $region18: #{tpu_custom_call.1} parent=1 // pred_check
      _
    $region19: #{tpu_custom_call.1} parent=1 // pred_check_branch
      %40 = sbr.rel (0) target = $region21
    $region20: #{tpu_custom_call.1} parent=1 // pred_region
      _
    $region21: #{tpu_custom_call.1} parent=1 // pred_fallthru
      _
    // Predicated region
    $region22: #{tpu_custom_call.1} parent=1 // pred_check
      _
    $region23: #{tpu_custom_call.1} parent=1 // pred_check_branch
      %42 = sbr.rel (0) target = $region25
    $region24: #{tpu_custom_call.1} parent=1 // pred_region
      %43 = dma.done [#allocation3], 16
    $region25: #{tpu_custom_call.1} parent=1 // pred_fallthru
      _
    // Predicated region
    $region26: #{tpu_custom_call.1} parent=1 // pred_check
      _
    $region27: #{tpu_custom_call.1} parent=1 // pred_check_branch
      %45 = sbr.rel (0) target = $region29
    $region28: #{tpu_custom_call.1} parent=1 // pred_region
      %46 = dma.done [#allocation6], 16384
    $region29: #{tpu_custom_call.1} parent=1 // pred_fallthru
      _
    %v48 = vlaneseq
    %v49 = vshrl.u32 %v48, 7
    %v50 = vadd.s32 %v49, 8
    %v51 = vadd.s32 %v49, 16
    %v52 = vadd.s32 %v49, 24
    %v53 = vadd.s32 %v49, 32
    %v54 = vadd.s32 %v49, 40
    %v55 = vadd.s32 %v49, 48
    %v56 = vadd.s32 %v49, 56
    %v57 = vld [vmem:[#allocation2] sm:$0x1]
    %v58 = vlaneseq
    %v59 = vshrl.u32 %v58, 7
    %v60 = vsub.s32 0, %v59
    %v61 = vrot.slane %v57, %v60
    %vm62 = vcmp.eq.s32.totalorder %v49, %v61
    %vm63 = vcmp.eq.s32.totalorder %v50, %v61
    %vm64 = vcmp.eq.s32.totalorder %v51, %v61
    %vm65 = vcmp.eq.s32.totalorder %v52, %v61
    %vm66 = vcmp.eq.s32.totalorder %v53, %v61
    %vm67 = vcmp.eq.s32.totalorder %v54, %v61
    %vm68 = vcmp.eq.s32.totalorder %v55, %v61
    %vm69 = vcmp.eq.s32.totalorder %v56, %v61
    %v70 = vsel %vm62, 1, 0
    %v71 = vsel %vm63, 1, 0
    %v72 = vsel %vm64, 1, 0
    %v73 = vsel %vm65, 1, 0
    %v74 = vsel %vm66, 1, 0
    %v75 = vsel %vm67, 1, 0
    %v76 = vsel %vm68, 1, 0
    %v77 = vsel %vm69, 1, 0
    %v78 = vcvt.s32.f32 %v70
    %v79 = vcvt.s32.f32 %v71
    %v80 = vcvt.s32.f32 %v72
    %v81 = vcvt.s32.f32 %v73
    %v82 = vcvt.s32.f32 %v74
    %v83 = vcvt.s32.f32 %v75
    %v84 = vcvt.s32.f32 %v76
    %v85 = vcvt.s32.f32 %v77
    %v86 = vpack.c.bf16 %v79, %v78
    %v87 = vpack.c.bf16 %v81, %v80
    %v88 = vpack.c.bf16 %v83, %v82
    %v89 = vpack.c.bf16 %v85, %v84
    %v90 = vlaneseq
    %v91 = vand.u32 %v90, 127
    %v92 = vld [vmem:[%s0] sm:$0xff]
    %v93 = vld [vmem:[%s0 + $0x8] sm:$0xff]
    %v94 = vld [vmem:[%s0 + $0x10] sm:$0xff]
    %v95 = vld [vmem:[%s0 + $0x18] sm:$0xff]
    %v96 = vld [vmem:[%s0 + $0x20] sm:$0xff]
    %v97 = vld [vmem:[%s0 + $0x28] sm:$0xff]
    %v98 = vld [vmem:[%s0 + $0x30] sm:$0xff]
    %v99 = vld [vmem:[%s0 + $0x38] sm:$0xff]
    %v100 = vld [vmem:[%s0 + $0x40] sm:$0xff]
    %v101 = vld [vmem:[%s0 + $0x48] sm:$0xff]
    %v102 = vld [vmem:[%s0 + $0x50] sm:$0xff]
    %v103 = vld [vmem:[%s0 + $0x58] sm:$0xff]
    %v104 = vld [vmem:[%s0 + $0x60] sm:$0xff]
    %v105 = vld [vmem:[%s0 + $0x68] sm:$0xff]
    %v106 = vld [vmem:[%s0 + $0x70] sm:$0xff]
    %v107 = vld [vmem:[%s0 + $0x78] sm:$0xff]
    %108 = vset.pattern.permute.xlu0 0
    %109 = vperm.xlu0 %108, %v92
    %v110 = vpop.permute.xlu0 %109
    %111 = vset.pattern.permute.xlu0 0
    %112 = vperm.xlu0 %111, %v93
    %v113 = vpop.permute.xlu0 %112
    %114 = vset.pattern.permute.xlu0 0
    %115 = vperm.xlu0 %114, %v94
    %v116 = vpop.permute.xlu0 %115
    %117 = vset.pattern.permute.xlu0 0
    %118 = vperm.xlu0 %117, %v95
    %v119 = vpop.permute.xlu0 %118
    %120 = vset.pattern.permute.xlu0 0
    %121 = vperm.xlu0 %120, %v96
    %v122 = vpop.permute.xlu0 %121
    %123 = vset.pattern.permute.xlu0 0
    %124 = vperm.xlu0 %123, %v97
    %v125 = vpop.permute.xlu0 %124
    %126 = vset.pattern.permute.xlu0 0
    %127 = vperm.xlu0 %126, %v98
    %v128 = vpop.permute.xlu0 %127
    %129 = vset.pattern.permute.xlu0 0
    %130 = vperm.xlu0 %129, %v99
    %v131 = vpop.permute.xlu0 %130
    %132 = vset.pattern.permute.xlu0 0
    %133 = vperm.xlu0 %132, %v100
    %v134 = vpop.permute.xlu0 %133
    %135 = vset.pattern.permute.xlu0 0
    %136 = vperm.xlu0 %135, %v101
    %v137 = vpop.permute.xlu0 %136
    %138 = vset.pattern.permute.xlu0 0
    %139 = vperm.xlu0 %138, %v102
    %v140 = vpop.permute.xlu0 %139
    %141 = vset.pattern.permute.xlu0 0
    %142 = vperm.xlu0 %141, %v103
    %v143 = vpop.permute.xlu0 %142
    %144 = vset.pattern.permute.xlu0 0
    %145 = vperm.xlu0 %144, %v104
    %v146 = vpop.permute.xlu0 %145
    %147 = vset.pattern.permute.xlu0 0
    %148 = vperm.xlu0 %147, %v105
    %v149 = vpop.permute.xlu0 %148
    %150 = vset.pattern.permute.xlu0 0
    %151 = vperm.xlu0 %150, %v106
    %v152 = vpop.permute.xlu0 %151
    %153 = vset.pattern.permute.xlu0 0
    %154 = vperm.xlu0 %153, %v107
    %v155 = vpop.permute.xlu0 %154
    %vm156 = vcmp.eq.s32.totalorder %v91, %v110
    %vm157 = vcmp.eq.s32.totalorder %v91, %v113
    %vm158 = vcmp.eq.s32.totalorder %v91, %v116
    %vm159 = vcmp.eq.s32.totalorder %v91, %v119
    %vm160 = vcmp.eq.s32.totalorder %v91, %v122
    %vm161 = vcmp.eq.s32.totalorder %v91, %v125
    %vm162 = vcmp.eq.s32.totalorder %v91, %v128
    %vm163 = vcmp.eq.s32.totalorder %v91, %v131
    %vm164 = vcmp.eq.s32.totalorder %v91, %v134
    %vm165 = vcmp.eq.s32.totalorder %v91, %v137
    %vm166 = vcmp.eq.s32.totalorder %v91, %v140
    %vm167 = vcmp.eq.s32.totalorder %v91, %v143
    %vm168 = vcmp.eq.s32.totalorder %v91, %v146
    %vm169 = vcmp.eq.s32.totalorder %v91, %v149
    %vm170 = vcmp.eq.s32.totalorder %v91, %v152
    %vm171 = vcmp.eq.s32.totalorder %v91, %v155
    %v172 = vsel %vm156, 1, 0
    %v173 = vsel %vm157, 1, 0
    %v174 = vsel %vm158, 1, 0
    %v175 = vsel %vm159, 1, 0
    %v176 = vsel %vm160, 1, 0
    %v177 = vsel %vm161, 1, 0
    %v178 = vsel %vm162, 1, 0
    %v179 = vsel %vm163, 1, 0
    %v180 = vsel %vm164, 1, 0
    %v181 = vsel %vm165, 1, 0
    %v182 = vsel %vm166, 1, 0
    %v183 = vsel %vm167, 1, 0
    %v184 = vsel %vm168, 1, 0
    %v185 = vsel %vm169, 1, 0
    %v186 = vsel %vm170, 1, 0
    %v187 = vsel %vm171, 1, 0
    %v188 = vcvt.s32.f32 %v172
    %v189 = vcvt.s32.f32 %v173
    %v190 = vcvt.s32.f32 %v174
    %v191 = vcvt.s32.f32 %v175
    %v192 = vcvt.s32.f32 %v176
    %v193 = vcvt.s32.f32 %v177
    %v194 = vcvt.s32.f32 %v178
    %v195 = vcvt.s32.f32 %v179
    %v196 = vcvt.s32.f32 %v180
    %v197 = vcvt.s32.f32 %v181
    %v198 = vcvt.s32.f32 %v182
    %v199 = vcvt.s32.f32 %v183
    %v200 = vcvt.s32.f32 %v184
    %v201 = vcvt.s32.f32 %v185
    %v202 = vcvt.s32.f32 %v186
    %v203 = vcvt.s32.f32 %v187
    %v204 = vpack.c.bf16 %v189, %v188
    %v205 = vpack.c.bf16 %v191, %v190
    %v206 = vpack.c.bf16 %v193, %v192
    %v207 = vpack.c.bf16 %v195, %v194
    %v208 = vpack.c.bf16 %v197, %v196
    %v209 = vpack.c.bf16 %v199, %v198
    %v210 = vpack.c.bf16 %v201, %v200
    %v211 = vpack.c.bf16 %v203, %v202
    %212 = vmatprep.subr.bf16.mxu0 0
    %213 = vmatpush1.bf16.msra.mxu0 %v211
    %214 = vmatprep.subr.bf16.mxu0 0
    %215 = vmatpush1.bf16.msra.mxu0 %v210
    %216 = vmatprep.subr.bf16.mxu0 0
    %217 = vmatpush1.bf16.msra.mxu0 %v209
    %218 = vmatprep.subr.bf16.mxu0 0
    %219 = vmatpush1.bf16.msra.mxu0 %v208
    %220 = vmatprep.subr.bf16.mxu0 0
    %221 = vmatpush1.bf16.msra.mxu0 %v207
    %222 = vmatprep.subr.bf16.mxu0 0
    %223 = vmatpush1.bf16.msra.mxu0 %v206
    %224 = vmatprep.subr.bf16.mxu0 0
    %225 = vmatpush1.bf16.msra.mxu0 %v205
    %226 = vmatprep.subr.bf16.mxu0 0
    %227 = vmatpush1.bf16.msra.mxu0 %v204
    %228 = vmatprep.subr.bf16.mxu0 0
    %229 = vmatpush2.bf16.msra.mxu0 0
    %230 = vmatprep.subr.bf16.mxu0 0
    %231 = vmatpush2.bf16.msra.mxu0 0
    %232 = vmatprep.subr.bf16.mxu0 0
    %233 = vmatpush2.bf16.msra.mxu0 0
    %234 = vmatprep.subr.bf16.mxu0 0
    %235 = vmatpush2.bf16.msra.mxu0 0
    %236 = vmatprep.subr.bf16.mxu0 0
    %237 = vmatpush2.bf16.msra.mxu0 0
    %238 = vmatprep.subr.bf16.mxu0 0
    %239 = vmatpush2.bf16.msra.mxu0 0
    %240 = vmatprep.subr.bf16.mxu0 0
    %241 = vmatpush2.bf16.msra.mxu0 0
    %242 = vmatprep.subr.bf16.mxu0 0
    %243 = vmatpush2.bf16.msra.mxu0 0
    %244 = vmatprep.mubr.bf16.mxu0 0
    %245 = vmatmul.mubr.bf16.gmra.mxu0 %v86
    %v246 = vpop.f32.mrf.mxu0
    %v247 = vadd.f32 0.0, %v246
    %v248 = vpop.f32.mrf.mxu0
    %v249 = vpop.f32.mrf.mxu0
    %v250 = vadd.f32 0.0, %v249
    %v251 = vpop.f32.mrf.mxu0
    %252 = vmatprep.mubr.bf16.mxu0 0
    %253 = vmatmul.mubr.bf16.gmra.mxu0 %v87
    %v254 = vpop.f32.mrf.mxu0
    %v255 = vadd.f32 0.0, %v254
    %v256 = vpop.f32.mrf.mxu0
    %v257 = vpop.f32.mrf.mxu0
    %v258 = vadd.f32 0.0, %v257
    %v259 = vpop.f32.mrf.mxu0
    %260 = vmatprep.mubr.bf16.mxu0 0
    %261 = vmatmul.mubr.bf16.gmra.mxu0 %v88
    %v262 = vpop.f32.mrf.mxu0
    %v263 = vadd.f32 0.0, %v262
    %v264 = vpop.f32.mrf.mxu0
    %v265 = vpop.f32.mrf.mxu0
    %v266 = vadd.f32 0.0, %v265
    %v267 = vpop.f32.mrf.mxu0
    %268 = vmatprep.mubr.bf16.mxu0 0
    %269 = vmatmul.mubr.bf16.gmra.mxu0 %v89
    %v270 = vpop.f32.mrf.mxu0
    %v271 = vadd.f32 0.0, %v270
    %v272 = vpop.f32.mrf.mxu0
    %v273 = vpop.f32.mrf.mxu0
    %v274 = vadd.f32 0.0, %v273
    %v275 = vpop.f32.mrf.mxu0
    %276 = vdwg.mxu0
    %vm277 = vcmp.eq.s32.totalorder %v49, %v91
    %vm278 = vcmp.eq.s32.totalorder %v50, %v91
    %vm279 = vcmp.eq.s32.totalorder %v51, %v91
    %vm280 = vcmp.eq.s32.totalorder %v52, %v91
    %vm281 = vcmp.eq.s32.totalorder %v53, %v91
    %vm282 = vcmp.eq.s32.totalorder %v54, %v91
    %vm283 = vcmp.eq.s32.totalorder %v55, %v91
    %vm284 = vcmp.eq.s32.totalorder %v56, %v91
    %v285 = vsel %vm277, 1.0, %v247
    %v286 = vsel %vm278, 1.0, %v250
    %v287 = vsel %vm279, 1.0, %v255
    %v288 = vsel %vm280, 1.0, %v258
    %v289 = vsel %vm281, 1.0, %v263
    %v290 = vsel %vm282, 1.0, %v266
    %v291 = vsel %vm283, 1.0, %v271
    %v292 = vsel %vm284, 1.0, %v274
    %vm293 = vcmask 523264
    %v294 = vsel %vm293, %v285, 0.0
    %295 = vadd.xlane.f32.xlu0 %v294
    %v296 = vpop.xlane.xlu0 %295
    %v297 = vsel %vm293, %v286, 0.0
    %298 = vadd.xlane.f32.xlu0 %v297
    %v299 = vpop.xlane.xlu0 %298
    %v300 = vsel %vm293, %v287, 0.0
    %301 = vadd.xlane.f32.xlu0 %v300
    %v302 = vpop.xlane.xlu0 %301
    %v303 = vsel %vm293, %v288, 0.0
    %304 = vadd.xlane.f32.xlu0 %v303
    %v305 = vpop.xlane.xlu0 %304
    %v306 = vsel %vm293, %v289, 0.0
    %307 = vadd.xlane.f32.xlu0 %v306
    %v308 = vpop.xlane.xlu0 %307
    %v309 = vsel %vm293, %v290, 0.0
    %310 = vadd.xlane.f32.xlu0 %v309
    %v311 = vpop.xlane.xlu0 %310
    %v312 = vsel %vm293, %v291, 0.0
    %313 = vadd.xlane.f32.xlu0 %v312
    %v314 = vpop.xlane.xlu0 %313
    %v315 = vsel %vm293, %v292, 0.0
    %316 = vadd.xlane.f32.xlu0 %v315
    %v317 = vpop.xlane.xlu0 %316
    %v318 = vrsqrt.pop %v296
    %v319 = vrsqrt.pop %v299
    %v320 = vrsqrt.pop %v302
    %v321 = vrsqrt.pop %v305
    %v322 = vrsqrt.pop %v308
    %v323 = vrsqrt.pop %v311
    %v324 = vrsqrt.pop %v314
    %v325 = vrsqrt.pop %v317
    %v326 = vld [vmem:[%s2] sm:$0xff]
    %v327 = vld [vmem:[%s2 + $0x8] sm:$0xff]
    %v328 = vld [vmem:[%s2 + $0x10] sm:$0xff]
    %v329 = vld [vmem:[%s2 + $0x18] sm:$0xff]
    %v330 = vld [vmem:[%s2 + $0x20] sm:$0xff]
    %v331 = vld [vmem:[%s2 + $0x28] sm:$0xff]
    %v332 = vld [vmem:[%s2 + $0x30] sm:$0xff]
    %v333 = vld [vmem:[%s2 + $0x38] sm:$0xff]
    %v334 = vld [vmem:[%s2 + $0x40] sm:$0xff]
    %v335 = vld [vmem:[%s2 + $0x48] sm:$0xff]
    %v336 = vld [vmem:[%s2 + $0x50] sm:$0xff]
    %v337 = vld [vmem:[%s2 + $0x58] sm:$0xff]
    %v338 = vld [vmem:[%s2 + $0x60] sm:$0xff]
    %v339 = vld [vmem:[%s2 + $0x68] sm:$0xff]
    %v340 = vld [vmem:[%s2 + $0x70] sm:$0xff]
    %v341 = vld [vmem:[%s2 + $0x78] sm:$0xff]
    %v342 = vld [vmem:[#allocation5] sm:$0xff]
    %v343 = vld [vmem:[#allocation5 + $0x8] sm:$0xff]
    %v344 = vld [vmem:[#allocation5 + $0x10] sm:$0xff]
    %v345 = vld [vmem:[#allocation5 + $0x18] sm:$0xff]
    %v346 = vld [vmem:[#allocation5 + $0x20] sm:$0xff]
    %v347 = vld [vmem:[#allocation5 + $0x28] sm:$0xff]
    %v348 = vld [vmem:[#allocation5 + $0x30] sm:$0xff]
    %v349 = vld [vmem:[#allocation5 + $0x38] sm:$0xff]
    %v350 = vld [vmem:[#allocation5 + $0x40] sm:$0xff]
    %v351 = vld [vmem:[#allocation5 + $0x48] sm:$0xff]
    %v352 = vld [vmem:[#allocation5 + $0x50] sm:$0xff]
    %v353 = vld [vmem:[#allocation5 + $0x58] sm:$0xff]
    %v354 = vld [vmem:[#allocation5 + $0x60] sm:$0xff]
    %v355 = vld [vmem:[#allocation5 + $0x68] sm:$0xff]
    %v356 = vld [vmem:[#allocation5 + $0x70] sm:$0xff]
    %v357 = vld [vmem:[#allocation5 + $0x78] sm:$0xff]
    %v358 = vld [vmem:[#allocation5 + $0x80] sm:$0xff]
    %v359 = vld [vmem:[#allocation5 + $0x88] sm:$0xff]
    %v360 = vld [vmem:[#allocation5 + $0x90] sm:$0xff]
    %v361 = vld [vmem:[#allocation5 + $0x98] sm:$0xff]
    %v362 = vld [vmem:[#allocation5 + $0xa0] sm:$0xff]
    %v363 = vld [vmem:[#allocation5 + $0xa8] sm:$0xff]
    %v364 = vld [vmem:[#allocation5 + $0xb0] sm:$0xff]
    %v365 = vld [vmem:[#allocation5 + $0xb8] sm:$0xff]
    %v366 = vld [vmem:[#allocation5 + $0xc0] sm:$0xff]
    %v367 = vld [vmem:[#allocation5 + $0xc8] sm:$0xff]
    %v368 = vld [vmem:[#allocation5 + $0xd0] sm:$0xff]
    %v369 = vld [vmem:[#allocation5 + $0xd8] sm:$0xff]
    %v370 = vld [vmem:[#allocation5 + $0xe0] sm:$0xff]
    %v371 = vld [vmem:[#allocation5 + $0xe8] sm:$0xff]
    %v372 = vld [vmem:[#allocation5 + $0xf0] sm:$0xff]
    %v373 = vld [vmem:[#allocation5 + $0xf8] sm:$0xff]
    %v374 = vld [vmem:[#allocation5 + $0x100] sm:$0xff]
    %v375 = vld [vmem:[#allocation5 + $0x108] sm:$0xff]
    %v376 = vld [vmem:[#allocation5 + $0x110] sm:$0xff]
    %v377 = vld [vmem:[#allocation5 + $0x118] sm:$0xff]
    %v378 = vld [vmem:[#allocation5 + $0x120] sm:$0xff]
    %v379 = vld [vmem:[#allocation5 + $0x128] sm:$0xff]
    %v380 = vld [vmem:[#allocation5 + $0x130] sm:$0xff]
    %v381 = vld [vmem:[#allocation5 + $0x138] sm:$0xff]
    %v382 = vld [vmem:[#allocation5 + $0x140] sm:$0xff]
    %v383 = vld [vmem:[#allocation5 + $0x148] sm:$0xff]
    %v384 = vld [vmem:[#allocation5 + $0x150] sm:$0xff]
    %v385 = vld [vmem:[#allocation5 + $0x158] sm:$0xff]
    %v386 = vld [vmem:[#allocation5 + $0x160] sm:$0xff]
    %v387 = vld [vmem:[#allocation5 + $0x168] sm:$0xff]
    %v388 = vld [vmem:[#allocation5 + $0x170] sm:$0xff]
    %v389 = vld [vmem:[#allocation5 + $0x178] sm:$0xff]
    %v390 = vld [vmem:[#allocation5 + $0x180] sm:$0xff]
    %v391 = vld [vmem:[#allocation5 + $0x188] sm:$0xff]
    %v392 = vld [vmem:[#allocation5 + $0x190] sm:$0xff]
    %v393 = vld [vmem:[#allocation5 + $0x198] sm:$0xff]
    %v394 = vld [vmem:[#allocation5 + $0x1a0] sm:$0xff]
    %v395 = vld [vmem:[#allocation5 + $0x1a8] sm:$0xff]
    %v396 = vld [vmem:[#allocation5 + $0x1b0] sm:$0xff]
    %v397 = vld [vmem:[#allocation5 + $0x1b8] sm:$0xff]
    %v398 = vld [vmem:[#allocation5 + $0x1c0] sm:$0xff]
    %v399 = vld [vmem:[#allocation5 + $0x1c8] sm:$0xff]
    %v400 = vld [vmem:[#allocation5 + $0x1d0] sm:$0xff]
    %v401 = vld [vmem:[#allocation5 + $0x1d8] sm:$0xff]
    %v402 = vld [vmem:[#allocation5 + $0x1e0] sm:$0xff]
    %v403 = vld [vmem:[#allocation5 + $0x1e8] sm:$0xff]
    %v404 = vld [vmem:[#allocation5 + $0x1f0] sm:$0xff]
    %v405 = vld [vmem:[#allocation5 + $0x1f8] sm:$0xff]
    %v406 = vld [vmem:[#allocation5 + $0x200] sm:$0xff]
    %v407 = vld [vmem:[#allocation5 + $0x208] sm:$0xff]
    %v408 = vld [vmem:[#allocation5 + $0x210] sm:$0xff]
    %v409 = vld [vmem:[#allocation5 + $0x218] sm:$0xff]
    %v410 = vld [vmem:[#allocation5 + $0x220] sm:$0xff]
    %v411 = vld [vmem:[#allocation5 + $0x228] sm:$0xff]
    %v412 = vld [vmem:[#allocation5 + $0x230] sm:$0xff]
    %v413 = vld [vmem:[#allocation5 + $0x238] sm:$0xff]
    %v414 = vld [vmem:[#allocation5 + $0x240] sm:$0xff]
    %v415 = vld [vmem:[#allocation5 + $0x248] sm:$0xff]
    %v416 = vld [vmem:[#allocation5 + $0x250] sm:$0xff]
    %v417 = vld [vmem:[#allocation5 + $0x258] sm:$0xff]
    %v418 = vld [vmem:[#allocation5 + $0x260] sm:$0xff]
    %v419 = vld [vmem:[#allocation5 + $0x268] sm:$0xff]
    %v420 = vld [vmem:[#allocation5 + $0x270] sm:$0xff]
    %v421 = vld [vmem:[#allocation5 + $0x278] sm:$0xff]
    %v422 = vld [vmem:[#allocation5 + $0x280] sm:$0xff]
    %v423 = vld [vmem:[#allocation5 + $0x288] sm:$0xff]
    %v424 = vld [vmem:[#allocation5 + $0x290] sm:$0xff]
    %v425 = vld [vmem:[#allocation5 + $0x298] sm:$0xff]
    %v426 = vld [vmem:[#allocation5 + $0x2a0] sm:$0xff]
    %v427 = vld [vmem:[#allocation5 + $0x2a8] sm:$0xff]
    %v428 = vld [vmem:[#allocation5 + $0x2b0] sm:$0xff]
    %v429 = vld [vmem:[#allocation5 + $0x2b8] sm:$0xff]
    %v430 = vld [vmem:[#allocation5 + $0x2c0] sm:$0xff]
    %v431 = vld [vmem:[#allocation5 + $0x2c8] sm:$0xff]
    %v432 = vld [vmem:[#allocation5 + $0x2d0] sm:$0xff]
    %v433 = vld [vmem:[#allocation5 + $0x2d8] sm:$0xff]
    %v434 = vld [vmem:[#allocation5 + $0x2e0] sm:$0xff]
    %v435 = vld [vmem:[#allocation5 + $0x2e8] sm:$0xff]
    %v436 = vld [vmem:[#allocation5 + $0x2f0] sm:$0xff]
    %v437 = vld [vmem:[#allocation5 + $0x2f8] sm:$0xff]
    %v438 = vld [vmem:[#allocation5 + $0x300] sm:$0xff]
    %v439 = vld [vmem:[#allocation5 + $0x308] sm:$0xff]
    %v440 = vld [vmem:[#allocation5 + $0x310] sm:$0xff]
    %v441 = vld [vmem:[#allocation5 + $0x318] sm:$0xff]
    %v442 = vld [vmem:[#allocation5 + $0x320] sm:$0xff]
    %v443 = vld [vmem:[#allocation5 + $0x328] sm:$0xff]
    %v444 = vld [vmem:[#allocation5 + $0x330] sm:$0xff]
    %v445 = vld [vmem:[#allocation5 + $0x338] sm:$0xff]
    %v446 = vld [vmem:[#allocation5 + $0x340] sm:$0xff]
    %v447 = vld [vmem:[#allocation5 + $0x348] sm:$0xff]
    %v448 = vld [vmem:[#allocation5 + $0x350] sm:$0xff]
    %v449 = vld [vmem:[#allocation5 + $0x358] sm:$0xff]
    %v450 = vld [vmem:[#allocation5 + $0x360] sm:$0xff]
    %v451 = vld [vmem:[#allocation5 + $0x368] sm:$0xff]
    %v452 = vld [vmem:[#allocation5 + $0x370] sm:$0xff]
    %v453 = vld [vmem:[#allocation5 + $0x378] sm:$0xff]
    %v454 = vld [vmem:[#allocation5 + $0x380] sm:$0xff]
    %v455 = vld [vmem:[#allocation5 + $0x388] sm:$0xff]
    %v456 = vld [vmem:[#allocation5 + $0x390] sm:$0xff]
    %v457 = vld [vmem:[#allocation5 + $0x398] sm:$0xff]
    %v458 = vld [vmem:[#allocation5 + $0x3a0] sm:$0xff]
    %v459 = vld [vmem:[#allocation5 + $0x3a8] sm:$0xff]
    %v460 = vld [vmem:[#allocation5 + $0x3b0] sm:$0xff]
    %v461 = vld [vmem:[#allocation5 + $0x3b8] sm:$0xff]
    %v462 = vld [vmem:[#allocation5 + $0x3c0] sm:$0xff]
    %v463 = vld [vmem:[#allocation5 + $0x3c8] sm:$0xff]
    %v464 = vld [vmem:[#allocation5 + $0x3d0] sm:$0xff]
    %v465 = vld [vmem:[#allocation5 + $0x3d8] sm:$0xff]
    %v466 = vld [vmem:[#allocation5 + $0x3e0] sm:$0xff]
    %v467 = vld [vmem:[#allocation5 + $0x3e8] sm:$0xff]
    %v468 = vld [vmem:[#allocation5 + $0x3f0] sm:$0xff]
    %v469 = vld [vmem:[#allocation5 + $0x3f8] sm:$0xff]
    %v486 = vunpack.c.l.b16 %v326
    %v487 = vunpack.c.h.b16 %v326
    %v488 = vunpack.c.l.b16 %v327
    %v489 = vunpack.c.h.b16 %v327
    %v490 = vunpack.c.l.b16 %v328
    %v491 = vunpack.c.h.b16 %v328
    %v492 = vunpack.c.l.b16 %v329
    %v493 = vunpack.c.h.b16 %v329
    %v494 = vunpack.c.l.b16 %v330
    %v495 = vunpack.c.h.b16 %v330
    %v496 = vunpack.c.l.b16 %v331
    %v497 = vunpack.c.h.b16 %v331
    %v498 = vunpack.c.l.b16 %v332
    %v499 = vunpack.c.h.b16 %v332
    %v500 = vunpack.c.l.b16 %v333
    %v501 = vunpack.c.h.b16 %v333
    %v502 = vunpack.c.l.b16 %v334
    %v503 = vunpack.c.h.b16 %v334
    %v504 = vunpack.c.l.b16 %v335
    %v505 = vunpack.c.h.b16 %v335
    %v506 = vunpack.c.l.b16 %v336
    %v507 = vunpack.c.h.b16 %v336
    %v508 = vunpack.c.l.b16 %v337
    %v509 = vunpack.c.h.b16 %v337
    %v510 = vunpack.c.l.b16 %v338
    %v511 = vunpack.c.h.b16 %v338
    %v512 = vunpack.c.l.b16 %v339
    %v513 = vunpack.c.h.b16 %v339
    %v514 = vunpack.c.l.b16 %v340
    %v515 = vunpack.c.h.b16 %v340
    %v516 = vunpack.c.l.b16 %v341
    %v517 = vunpack.c.h.b16 %v341
    %v518 = vpack.c.b16 %v490, %v486
    %v519 = vpack.c.b16 %v491, %v487
    %v520 = vpack.c.b16 %v492, %v488
    %v521 = vpack.c.b16 %v493, %v489
    %v522 = vpack.c.b16 %v498, %v494
    %v523 = vpack.c.b16 %v499, %v495
    %v524 = vpack.c.b16 %v500, %v496
    %v525 = vpack.c.b16 %v501, %v497
    %v526 = vpack.c.b16 %v506, %v502
    %v527 = vpack.c.b16 %v507, %v503
    %v528 = vpack.c.b16 %v508, %v504
    %v529 = vpack.c.b16 %v509, %v505
    %v530 = vpack.c.b16 %v514, %v510
    %v531 = vpack.c.b16 %v515, %v511
    %v532 = vpack.c.b16 %v516, %v512
    %v533 = vpack.c.b16 %v517, %v513
    %v678 = vunpack.c.l.b16 %v342
    %v679 = vunpack.c.h.b16 %v342
    %v680 = vunpack.c.l.b16 %v343
    %v681 = vunpack.c.h.b16 %v343
    %v682 = vunpack.c.l.b16 %v344
    %v683 = vunpack.c.h.b16 %v344
    %v684 = vunpack.c.l.b16 %v345
    %v685 = vunpack.c.h.b16 %v345
    %v686 = vunpack.c.l.b16 %v346
    %v687 = vunpack.c.h.b16 %v346
    %v688 = vunpack.c.l.b16 %v347
    %v689 = vunpack.c.h.b16 %v347
    %v690 = vunpack.c.l.b16 %v348
    %v691 = vunpack.c.h.b16 %v348
    %v692 = vunpack.c.l.b16 %v349
    %v693 = vunpack.c.h.b16 %v349
    %v694 = vunpack.c.l.b16 %v350
    %v695 = vunpack.c.h.b16 %v350
    %v696 = vunpack.c.l.b16 %v351
    %v697 = vunpack.c.h.b16 %v351
    %v698 = vunpack.c.l.b16 %v352
    %v699 = vunpack.c.h.b16 %v352
    %v700 = vunpack.c.l.b16 %v353
    %v701 = vunpack.c.h.b16 %v353
    %v702 = vunpack.c.l.b16 %v354
    %v703 = vunpack.c.h.b16 %v354
    %v704 = vunpack.c.l.b16 %v355
    %v705 = vunpack.c.h.b16 %v355
    %v706 = vunpack.c.l.b16 %v356
    %v707 = vunpack.c.h.b16 %v356
    %v708 = vunpack.c.l.b16 %v357
    %v709 = vunpack.c.h.b16 %v357
    %v710 = vunpack.c.l.b16 %v358
    %v711 = vunpack.c.h.b16 %v358
    %v712 = vunpack.c.l.b16 %v359
    %v713 = vunpack.c.h.b16 %v359
    %v714 = vunpack.c.l.b16 %v360
    %v715 = vunpack.c.h.b16 %v360
    %v716 = vunpack.c.l.b16 %v361
    %v717 = vunpack.c.h.b16 %v361
    %v718 = vunpack.c.l.b16 %v362
    %v719 = vunpack.c.h.b16 %v362
    %v720 = vunpack.c.l.b16 %v363
    %v721 = vunpack.c.h.b16 %v363
    %v722 = vunpack.c.l.b16 %v364
    %v723 = vunpack.c.h.b16 %v364
    %v724 = vunpack.c.l.b16 %v365
    %v725 = vunpack.c.h.b16 %v365
    %v726 = vunpack.c.l.b16 %v366
    %v727 = vunpack.c.h.b16 %v366
    %v728 = vunpack.c.l.b16 %v367
    %v729 = vunpack.c.h.b16 %v367
    %v730 = vunpack.c.l.b16 %v368
    %v731 = vunpack.c.h.b16 %v368
    %v732 = vunpack.c.l.b16 %v369
    %v733 = vunpack.c.h.b16 %v369
    %v734 = vunpack.c.l.b16 %v370
    %v735 = vunpack.c.h.b16 %v370
    %v736 = vunpack.c.l.b16 %v371
    %v737 = vunpack.c.h.b16 %v371
    %v738 = vunpack.c.l.b16 %v372
    %v739 = vunpack.c.h.b16 %v372
    %v740 = vunpack.c.l.b16 %v373
    %v741 = vunpack.c.h.b16 %v373
    %v742 = vunpack.c.l.b16 %v374
    %v743 = vunpack.c.h.b16 %v374
    %v744 = vunpack.c.l.b16 %v375
    %v745 = vunpack.c.h.b16 %v375
    %v746 = vunpack.c.l.b16 %v376
    %v747 = vunpack.c.h.b16 %v376
    %v748 = vunpack.c.l.b16 %v377
    %v749 = vunpack.c.h.b16 %v377
    %v750 = vunpack.c.l.b16 %v378
    %v751 = vunpack.c.h.b16 %v378
    %v752 = vunpack.c.l.b16 %v379
    %v753 = vunpack.c.h.b16 %v379
    %v754 = vunpack.c.l.b16 %v380
    %v755 = vunpack.c.h.b16 %v380
    %v756 = vunpack.c.l.b16 %v381
    %v757 = vunpack.c.h.b16 %v381
    %v758 = vunpack.c.l.b16 %v382
    %v759 = vunpack.c.h.b16 %v382
    %v760 = vunpack.c.l.b16 %v383
    %v761 = vunpack.c.h.b16 %v383
    %v762 = vunpack.c.l.b16 %v384
    %v763 = vunpack.c.h.b16 %v384
    %v764 = vunpack.c.l.b16 %v385
    %v765 = vunpack.c.h.b16 %v385
    %v766 = vunpack.c.l.b16 %v386
    %v767 = vunpack.c.h.b16 %v386
    %v768 = vunpack.c.l.b16 %v387
    %v769 = vunpack.c.h.b16 %v387
    %v770 = vunpack.c.l.b16 %v388
    %v771 = vunpack.c.h.b16 %v388
    %v772 = vunpack.c.l.b16 %v389
    %v773 = vunpack.c.h.b16 %v389
    %v774 = vunpack.c.l.b16 %v390
    %v775 = vunpack.c.h.b16 %v390
    %v776 = vunpack.c.l.b16 %v391
    %v777 = vunpack.c.h.b16 %v391
    %v778 = vunpack.c.l.b16 %v392
    %v779 = vunpack.c.h.b16 %v392
    %v780 = vunpack.c.l.b16 %v393
    %v781 = vunpack.c.h.b16 %v393
    %v782 = vunpack.c.l.b16 %v394
    %v783 = vunpack.c.h.b16 %v394
    %v784 = vunpack.c.l.b16 %v395
    %v785 = vunpack.c.h.b16 %v395
    %v786 = vunpack.c.l.b16 %v396
    %v787 = vunpack.c.h.b16 %v396
    %v788 = vunpack.c.l.b16 %v397
    %v789 = vunpack.c.h.b16 %v397
    %v790 = vunpack.c.l.b16 %v398
    %v791 = vunpack.c.h.b16 %v398
    %v792 = vunpack.c.l.b16 %v399
    %v793 = vunpack.c.h.b16 %v399
    %v794 = vunpack.c.l.b16 %v400
    %v795 = vunpack.c.h.b16 %v400
    %v796 = vunpack.c.l.b16 %v401
    %v797 = vunpack.c.h.b16 %v401
    %v798 = vunpack.c.l.b16 %v402
    %v799 = vunpack.c.h.b16 %v402
    %v800 = vunpack.c.l.b16 %v403
    %v801 = vunpack.c.h.b16 %v403
    %v802 = vunpack.c.l.b16 %v404
    %v803 = vunpack.c.h.b16 %v404
    %v804 = vunpack.c.l.b16 %v405
    %v805 = vunpack.c.h.b16 %v405
    %v806 = vunpack.c.l.b16 %v406
    %v807 = vunpack.c.h.b16 %v406
    %v808 = vunpack.c.l.b16 %v407
    %v809 = vunpack.c.h.b16 %v407
    %v810 = vunpack.c.l.b16 %v408
    %v811 = vunpack.c.h.b16 %v408
    %v812 = vunpack.c.l.b16 %v409
    %v813 = vunpack.c.h.b16 %v409
    %v814 = vunpack.c.l.b16 %v410
    %v815 = vunpack.c.h.b16 %v410
    %v816 = vunpack.c.l.b16 %v411
    %v817 = vunpack.c.h.b16 %v411
    %v818 = vunpack.c.l.b16 %v412
    %v819 = vunpack.c.h.b16 %v412
    %v820 = vunpack.c.l.b16 %v413
    %v821 = vunpack.c.h.b16 %v413
    %v822 = vunpack.c.l.b16 %v414
    %v823 = vunpack.c.h.b16 %v414
    %v824 = vunpack.c.l.b16 %v415
    %v825 = vunpack.c.h.b16 %v415
    %v826 = vunpack.c.l.b16 %v416
    %v827 = vunpack.c.h.b16 %v416
    %v828 = vunpack.c.l.b16 %v417
    %v829 = vunpack.c.h.b16 %v417
    %v830 = vunpack.c.l.b16 %v418
    %v831 = vunpack.c.h.b16 %v418
    %v832 = vunpack.c.l.b16 %v419
    %v833 = vunpack.c.h.b16 %v419
    %v834 = vunpack.c.l.b16 %v420
    %v835 = vunpack.c.h.b16 %v420
    %v836 = vunpack.c.l.b16 %v421
    %v837 = vunpack.c.h.b16 %v421
    %v838 = vunpack.c.l.b16 %v422
    %v839 = vunpack.c.h.b16 %v422
    %v840 = vunpack.c.l.b16 %v423
    %v841 = vunpack.c.h.b16 %v423
    %v842 = vunpack.c.l.b16 %v424
    %v843 = vunpack.c.h.b16 %v424
    %v844 = vunpack.c.l.b16 %v425
    %v845 = vunpack.c.h.b16 %v425
    %v846 = vunpack.c.l.b16 %v426
    %v847 = vunpack.c.h.b16 %v426
    %v848 = vunpack.c.l.b16 %v427
    %v849 = vunpack.c.h.b16 %v427
    %v850 = vunpack.c.l.b16 %v428
    %v851 = vunpack.c.h.b16 %v428
    %v852 = vunpack.c.l.b16 %v429
    %v853 = vunpack.c.h.b16 %v429
    %v854 = vunpack.c.l.b16 %v430
    %v855 = vunpack.c.h.b16 %v430
    %v856 = vunpack.c.l.b16 %v431
    %v857 = vunpack.c.h.b16 %v431
    %v858 = vunpack.c.l.b16 %v432
    %v859 = vunpack.c.h.b16 %v432
    %v860 = vunpack.c.l.b16 %v433
    %v861 = vunpack.c.h.b16 %v433
    %v862 = vunpack.c.l.b16 %v434
    %v863 = vunpack.c.h.b16 %v434
    %v864 = vunpack.c.l.b16 %v435
    %v865 = vunpack.c.h.b16 %v435
    %v866 = vunpack.c.l.b16 %v436
    %v867 = vunpack.c.h.b16 %v436
    %v868 = vunpack.c.l.b16 %v437
    %v869 = vunpack.c.h.b16 %v437
    %v870 = vunpack.c.l.b16 %v438
    %v871 = vunpack.c.h.b16 %v438
    %v872 = vunpack.c.l.b16 %v439
    %v873 = vunpack.c.h.b16 %v439
    %v874 = vunpack.c.l.b16 %v440
    %v875 = vunpack.c.h.b16 %v440
    %v876 = vunpack.c.l.b16 %v441
    %v877 = vunpack.c.h.b16 %v441
    %v878 = vunpack.c.l.b16 %v442
    %v879 = vunpack.c.h.b16 %v442
    %v880 = vunpack.c.l.b16 %v443
    %v881 = vunpack.c.h.b16 %v443
    %v882 = vunpack.c.l.b16 %v444
    %v883 = vunpack.c.h.b16 %v444
    %v884 = vunpack.c.l.b16 %v445
    %v885 = vunpack.c.h.b16 %v445
    %v886 = vunpack.c.l.b16 %v446
    %v887 = vunpack.c.h.b16 %v446
    %v888 = vunpack.c.l.b16 %v447
    %v889 = vunpack.c.h.b16 %v447
    %v890 = vunpack.c.l.b16 %v448
    %v891 = vunpack.c.h.b16 %v448
    %v892 = vunpack.c.l.b16 %v449
    %v893 = vunpack.c.h.b16 %v449
    %v894 = vunpack.c.l.b16 %v450
    %v895 = vunpack.c.h.b16 %v450
    %v896 = vunpack.c.l.b16 %v451
    %v897 = vunpack.c.h.b16 %v451
    %v898 = vunpack.c.l.b16 %v452
    %v899 = vunpack.c.h.b16 %v452
    %v900 = vunpack.c.l.b16 %v453
    %v901 = vunpack.c.h.b16 %v453
    %v902 = vunpack.c.l.b16 %v454
    %v903 = vunpack.c.h.b16 %v454
    %v904 = vunpack.c.l.b16 %v455
    %v905 = vunpack.c.h.b16 %v455
    %v906 = vunpack.c.l.b16 %v456
    %v907 = vunpack.c.h.b16 %v456
    %v908 = vunpack.c.l.b16 %v457
    %v909 = vunpack.c.h.b16 %v457
    %v910 = vunpack.c.l.b16 %v458
    %v911 = vunpack.c.h.b16 %v458
    %v912 = vunpack.c.l.b16 %v459
    %v913 = vunpack.c.h.b16 %v459
    %v914 = vunpack.c.l.b16 %v460
    %v915 = vunpack.c.h.b16 %v460
    %v916 = vunpack.c.l.b16 %v461
    %v917 = vunpack.c.h.b16 %v461
    %v918 = vunpack.c.l.b16 %v462
    %v919 = vunpack.c.h.b16 %v462
    %v920 = vunpack.c.l.b16 %v463
    %v921 = vunpack.c.h.b16 %v463
    %v922 = vunpack.c.l.b16 %v464
    %v923 = vunpack.c.h.b16 %v464
    %v924 = vunpack.c.l.b16 %v465
    %v925 = vunpack.c.h.b16 %v465
    %v926 = vunpack.c.l.b16 %v466
    %v927 = vunpack.c.h.b16 %v466
    %v928 = vunpack.c.l.b16 %v467
    %v929 = vunpack.c.h.b16 %v467
    %v930 = vunpack.c.l.b16 %v468
    %v931 = vunpack.c.h.b16 %v468
    %v932 = vunpack.c.l.b16 %v469
    %v933 = vunpack.c.h.b16 %v469
    %v934 = vpack.c.b16 %v682, %v678
    %v935 = vpack.c.b16 %v683, %v679
    %v936 = vpack.c.b16 %v684, %v680
    %v937 = vpack.c.b16 %v685, %v681
    %v938 = vpack.c.b16 %v690, %v686
    %v939 = vpack.c.b16 %v691, %v687
    %v940 = vpack.c.b16 %v692, %v688
    %v941 = vpack.c.b16 %v693, %v689
    %v942 = vpack.c.b16 %v698, %v694
    %v943 = vpack.c.b16 %v699, %v695
    %v944 = vpack.c.b16 %v700, %v696
    %v945 = vpack.c.b16 %v701, %v697
    %v946 = vpack.c.b16 %v706, %v702
    %v947 = vpack.c.b16 %v707, %v703
    %v948 = vpack.c.b16 %v708, %v704
    %v949 = vpack.c.b16 %v709, %v705
    %v950 = vpack.c.b16 %v714, %v710
    %v951 = vpack.c.b16 %v715, %v711
    %v952 = vpack.c.b16 %v716, %v712
    %v953 = vpack.c.b16 %v717, %v713
    %v954 = vpack.c.b16 %v722, %v718
    %v955 = vpack.c.b16 %v723, %v719
    %v956 = vpack.c.b16 %v724, %v720
    %v957 = vpack.c.b16 %v725, %v721
    %v958 = vpack.c.b16 %v730, %v726
    %v959 = vpack.c.b16 %v731, %v727
    %v960 = vpack.c.b16 %v732, %v728
    %v961 = vpack.c.b16 %v733, %v729
    %v962 = vpack.c.b16 %v738, %v734
    %v963 = vpack.c.b16 %v739, %v735
    %v964 = vpack.c.b16 %v740, %v736
    %v965 = vpack.c.b16 %v741, %v737
    %v966 = vpack.c.b16 %v746, %v742
    %v967 = vpack.c.b16 %v747, %v743
    %v968 = vpack.c.b16 %v748, %v744
    %v969 = vpack.c.b16 %v749, %v745
    %v970 = vpack.c.b16 %v754, %v750
    %v971 = vpack.c.b16 %v755, %v751
    %v972 = vpack.c.b16 %v756, %v752
    %v973 = vpack.c.b16 %v757, %v753
    %v974 = vpack.c.b16 %v762, %v758
    %v975 = vpack.c.b16 %v763, %v759
    %v976 = vpack.c.b16 %v764, %v760
    %v977 = vpack.c.b16 %v765, %v761
    %v978 = vpack.c.b16 %v770, %v766
    %v979 = vpack.c.b16 %v771, %v767
    %v980 = vpack.c.b16 %v772, %v768
    %v981 = vpack.c.b16 %v773, %v769
    %v982 = vpack.c.b16 %v778, %v774
    %v983 = vpack.c.b16 %v779, %v775
    %v984 = vpack.c.b16 %v780, %v776
    %v985 = vpack.c.b16 %v781, %v777
    %v986 = vpack.c.b16 %v786, %v782
    %v987 = vpack.c.b16 %v787, %v783
    %v988 = vpack.c.b16 %v788, %v784
    %v989 = vpack.c.b16 %v789, %v785
    %v990 = vpack.c.b16 %v794, %v790
    %v991 = vpack.c.b16 %v795, %v791
    %v992 = vpack.c.b16 %v796, %v792
    %v993 = vpack.c.b16 %v797, %v793
    %v994 = vpack.c.b16 %v802, %v798
    %v995 = vpack.c.b16 %v803, %v799
    %v996 = vpack.c.b16 %v804, %v800
    %v997 = vpack.c.b16 %v805, %v801
    %v998 = vpack.c.b16 %v810, %v806
    %v999 = vpack.c.b16 %v811, %v807
    %v1000 = vpack.c.b16 %v812, %v808
    %v1001 = vpack.c.b16 %v813, %v809
    %v1002 = vpack.c.b16 %v818, %v814
    %v1003 = vpack.c.b16 %v819, %v815
    %v1004 = vpack.c.b16 %v820, %v816
    %v1005 = vpack.c.b16 %v821, %v817
    %v1006 = vpack.c.b16 %v826, %v822
    %v1007 = vpack.c.b16 %v827, %v823
    %v1008 = vpack.c.b16 %v828, %v824
    %v1009 = vpack.c.b16 %v829, %v825
    %v1010 = vpack.c.b16 %v834, %v830
    %v1011 = vpack.c.b16 %v835, %v831
    %v1012 = vpack.c.b16 %v836, %v832
    %v1013 = vpack.c.b16 %v837, %v833
    %v1014 = vpack.c.b16 %v842, %v838
    %v1015 = vpack.c.b16 %v843, %v839
    %v1016 = vpack.c.b16 %v844, %v840
    %v1017 = vpack.c.b16 %v845, %v841
    %v1018 = vpack.c.b16 %v850, %v846
    %v1019 = vpack.c.b16 %v851, %v847
    %v1020 = vpack.c.b16 %v852, %v848
    %v1021 = vpack.c.b16 %v853, %v849
    %v1022 = vpack.c.b16 %v858, %v854
    %v1023 = vpack.c.b16 %v859, %v855
    %v1024 = vpack.c.b16 %v860, %v856
    %v1025 = vpack.c.b16 %v861, %v857
    %v1026 = vpack.c.b16 %v866, %v862
    %v1027 = vpack.c.b16 %v867, %v863
    %v1028 = vpack.c.b16 %v868, %v864
    %v1029 = vpack.c.b16 %v869, %v865
    %v1030 = vpack.c.b16 %v874, %v870
    %v1031 = vpack.c.b16 %v875, %v871
    %v1032 = vpack.c.b16 %v876, %v872
    %v1033 = vpack.c.b16 %v877, %v873
    %v1034 = vpack.c.b16 %v882, %v878
    %v1035 = vpack.c.b16 %v883, %v879
    %v1036 = vpack.c.b16 %v884, %v880
    %v1037 = vpack.c.b16 %v885, %v881
    %v1038 = vpack.c.b16 %v890, %v886
    %v1039 = vpack.c.b16 %v891, %v887
    %v1040 = vpack.c.b16 %v892, %v888
    %v1041 = vpack.c.b16 %v893, %v889
    %v1042 = vpack.c.b16 %v898, %v894
    %v1043 = vpack.c.b16 %v899, %v895
    %v1044 = vpack.c.b16 %v900, %v896
    %v1045 = vpack.c.b16 %v901, %v897
    %v1046 = vpack.c.b16 %v906, %v902
    %v1047 = vpack.c.b16 %v907, %v903
    %v1048 = vpack.c.b16 %v908, %v904
    %v1049 = vpack.c.b16 %v909, %v905
    %v1050 = vpack.c.b16 %v914, %v910
    %v1051 = vpack.c.b16 %v915, %v911
    %v1052 = vpack.c.b16 %v916, %v912
    %v1053 = vpack.c.b16 %v917, %v913
    %v1054 = vpack.c.b16 %v922, %v918
    %v1055 = vpack.c.b16 %v923, %v919
    %v1056 = vpack.c.b16 %v924, %v920
    %v1057 = vpack.c.b16 %v925, %v921
    %v1058 = vpack.c.b16 %v930, %v926
    %v1059 = vpack.c.b16 %v931, %v927
    %v1060 = vpack.c.b16 %v932, %v928
    %v1061 = vpack.c.b16 %v933, %v929
    %1190 = vmatprep.subr.bf16.mxu0 %v963
    %1191 = vmatpush1.bf16.msra.mxu0 %v962
    %1192 = vmatprep.subr.bf16.mxu0 %v959
    %1193 = vmatpush1.bf16.msra.mxu0 %v958
    %1194 = vmatprep.subr.bf16.mxu0 %v955
    %1195 = vmatpush1.bf16.msra.mxu0 %v954
    %1196 = vmatprep.subr.bf16.mxu0 %v951
    %1197 = vmatpush1.bf16.msra.mxu0 %v950
    %1198 = vmatprep.subr.bf16.mxu0 %v947
    %1199 = vmatpush1.bf16.msra.mxu0 %v946
    %1200 = vmatprep.subr.bf16.mxu0 %v943
    %1201 = vmatpush1.bf16.msra.mxu0 %v942
    %1202 = vmatprep.subr.bf16.mxu0 %v939
    %1203 = vmatpush1.bf16.msra.mxu0 %v938
    %1204 = vmatprep.subr.bf16.mxu0 %v935
    %1205 = vmatpush1.bf16.msra.mxu0 %v934
    %1206 = vmatprep.subr.bf16.mxu0 %v995
    %1207 = vmatpush2.bf16.msra.mxu0 %v994
    %1208 = vmatprep.subr.bf16.mxu0 %v991
    %1209 = vmatpush2.bf16.msra.mxu0 %v990
    %1210 = vmatprep.subr.bf16.mxu0 %v987
    %1211 = vmatpush2.bf16.msra.mxu0 %v986
    %1212 = vmatprep.subr.bf16.mxu0 %v983
    %1213 = vmatpush2.bf16.msra.mxu0 %v982
    %1214 = vmatprep.subr.bf16.mxu0 %v979
    %1215 = vmatpush2.bf16.msra.mxu0 %v978
    %1216 = vmatprep.subr.bf16.mxu0 %v975
    %1217 = vmatpush2.bf16.msra.mxu0 %v974
    %1218 = vmatprep.subr.bf16.mxu0 %v971
    %1219 = vmatpush2.bf16.msra.mxu0 %v970
    %1220 = vmatprep.subr.bf16.mxu0 %v967
    %1221 = vmatpush2.bf16.msra.mxu0 %v966
    %1222 = vmatprep.mubr.bf16.mxu0 %v519
    %1223 = vmatmul.mubr.bf16.gmra.mxu0 %v518
    %v1224 = vpop.f32.mrf.mxu0
    %v1225 = vadd.f32 0.0, %v1224
    %v1226 = vpop.f32.mrf.mxu0
    %v1227 = vadd.f32 0.0, %v1226
    %v1228 = vpop.f32.mrf.mxu0
    %v1229 = vadd.f32 0.0, %v1228
    %v1230 = vpop.f32.mrf.mxu0
    %v1231 = vadd.f32 0.0, %v1230
    %1232 = vmatprep.mubr.bf16.mxu0 %v523
    %1233 = vmatmul.mubr.bf16.gmra.mxu0 %v522
    %v1234 = vpop.f32.mrf.mxu0
    %v1235 = vadd.f32 0.0, %v1234
    %v1236 = vpop.f32.mrf.mxu0
    %v1237 = vadd.f32 0.0, %v1236
    %v1238 = vpop.f32.mrf.mxu0
    %v1239 = vadd.f32 0.0, %v1238
    %v1240 = vpop.f32.mrf.mxu0
    %v1241 = vadd.f32 0.0, %v1240
    %1242 = vmatprep.mubr.bf16.mxu0 %v527
    %1243 = vmatmul.mubr.bf16.gmra.mxu0 %v526
    %v1244 = vpop.f32.mrf.mxu0
    %v1245 = vadd.f32 0.0, %v1244
    %v1246 = vpop.f32.mrf.mxu0
    %v1247 = vadd.f32 0.0, %v1246
    %v1248 = vpop.f32.mrf.mxu0
    %v1249 = vadd.f32 0.0, %v1248
    %v1250 = vpop.f32.mrf.mxu0
    %v1251 = vadd.f32 0.0, %v1250
    %1252 = vmatprep.mubr.bf16.mxu0 %v531
    %1253 = vmatmul.mubr.bf16.gmra.mxu0 %v530
    %v1254 = vpop.f32.mrf.mxu0
    %v1255 = vadd.f32 0.0, %v1254
    %v1256 = vpop.f32.mrf.mxu0
    %v1257 = vadd.f32 0.0, %v1256
    %v1258 = vpop.f32.mrf.mxu0
    %v1259 = vadd.f32 0.0, %v1258
    %v1260 = vpop.f32.mrf.mxu0
    %v1261 = vadd.f32 0.0, %v1260
    %1262 = vdwg.mxu0
    %1263 = vmatprep.subr.bf16.mxu0 %v1027
    %1264 = vmatpush1.bf16.msra.mxu0 %v1026
    %1265 = vmatprep.subr.bf16.mxu0 %v1023
    %1266 = vmatpush1.bf16.msra.mxu0 %v1022
    %1267 = vmatprep.subr.bf16.mxu0 %v1019
    %1268 = vmatpush1.bf16.msra.mxu0 %v1018
    %1269 = vmatprep.subr.bf16.mxu0 %v1015
    %1270 = vmatpush1.bf16.msra.mxu0 %v1014
    %1271 = vmatprep.subr.bf16.mxu0 %v1011
    %1272 = vmatpush1.bf16.msra.mxu0 %v1010
    %1273 = vmatprep.subr.bf16.mxu0 %v1007
    %1274 = vmatpush1.bf16.msra.mxu0 %v1006
    %1275 = vmatprep.subr.bf16.mxu0 %v1003
    %1276 = vmatpush1.bf16.msra.mxu0 %v1002
    %1277 = vmatprep.subr.bf16.mxu0 %v999
    %1278 = vmatpush1.bf16.msra.mxu0 %v998
    %1279 = vmatprep.subr.bf16.mxu0 %v1059
    %1280 = vmatpush2.bf16.msra.mxu0 %v1058
    %1281 = vmatprep.subr.bf16.mxu0 %v1055
    %1282 = vmatpush2.bf16.msra.mxu0 %v1054
    %1283 = vmatprep.subr.bf16.mxu0 %v1051
    %1284 = vmatpush2.bf16.msra.mxu0 %v1050
    %1285 = vmatprep.subr.bf16.mxu0 %v1047
    %1286 = vmatpush2.bf16.msra.mxu0 %v1046
    %1287 = vmatprep.subr.bf16.mxu0 %v1043
    %1288 = vmatpush2.bf16.msra.mxu0 %v1042
    %1289 = vmatprep.subr.bf16.mxu0 %v1039
    %1290 = vmatpush2.bf16.msra.mxu0 %v1038
    %1291 = vmatprep.subr.bf16.mxu0 %v1035
    %1292 = vmatpush2.bf16.msra.mxu0 %v1034
    %1293 = vmatprep.subr.bf16.mxu0 %v1031
    %1294 = vmatpush2.bf16.msra.mxu0 %v1030
    %1295 = vmatprep.mubr.bf16.mxu0 %v521
    %1296 = vmatmul.mubr.bf16.gmra.mxu0 %v520
    %v1297 = vpop.f32.mrf.mxu0
    %v1298 = vadd.f32 %v1225, %v1297
    %v1299 = vpop.f32.mrf.mxu0
    %v1300 = vadd.f32 %v1227, %v1299
    %v1301 = vpop.f32.mrf.mxu0
    %v1302 = vadd.f32 %v1229, %v1301
    %v1303 = vpop.f32.mrf.mxu0
    %v1304 = vadd.f32 %v1231, %v1303
    %1305 = vmatprep.mubr.bf16.mxu0 %v525
    %1306 = vmatmul.mubr.bf16.gmra.mxu0 %v524
    %v1307 = vpop.f32.mrf.mxu0
    %v1308 = vadd.f32 %v1235, %v1307
    %v1309 = vpop.f32.mrf.mxu0
    %v1310 = vadd.f32 %v1237, %v1309
    %v1311 = vpop.f32.mrf.mxu0
    %v1312 = vadd.f32 %v1239, %v1311
    %v1313 = vpop.f32.mrf.mxu0
    %v1314 = vadd.f32 %v1241, %v1313
    %1315 = vmatprep.mubr.bf16.mxu0 %v529
    %1316 = vmatmul.mubr.bf16.gmra.mxu0 %v528
    %v1317 = vpop.f32.mrf.mxu0
    %v1318 = vadd.f32 %v1245, %v1317
    %v1319 = vpop.f32.mrf.mxu0
    %v1320 = vadd.f32 %v1247, %v1319
    %v1321 = vpop.f32.mrf.mxu0
    %v1322 = vadd.f32 %v1249, %v1321
    %v1323 = vpop.f32.mrf.mxu0
    %v1324 = vadd.f32 %v1251, %v1323
    %1325 = vmatprep.mubr.bf16.mxu0 %v533
    %1326 = vmatmul.mubr.bf16.gmra.mxu0 %v532
    %v1327 = vpop.f32.mrf.mxu0
    %v1328 = vadd.f32 %v1255, %v1327
    %v1329 = vpop.f32.mrf.mxu0
    %v1330 = vadd.f32 %v1257, %v1329
    %v1331 = vpop.f32.mrf.mxu0
    %v1332 = vadd.f32 %v1259, %v1331
    %v1333 = vpop.f32.mrf.mxu0
    %v1334 = vadd.f32 %v1261, %v1333
    %1335 = vdwg.mxu0
    %1336 = vmatprep.subr.bf16.mxu0 %v965
    %1337 = vmatpush1.bf16.msra.mxu0 %v964
    %1338 = vmatprep.subr.bf16.mxu0 %v961
    %1339 = vmatpush1.bf16.msra.mxu0 %v960
    %1340 = vmatprep.subr.bf16.mxu0 %v957
    %1341 = vmatpush1.bf16.msra.mxu0 %v956
    %1342 = vmatprep.subr.bf16.mxu0 %v953
    %1343 = vmatpush1.bf16.msra.mxu0 %v952
    %1344 = vmatprep.subr.bf16.mxu0 %v949
    %1345 = vmatpush1.bf16.msra.mxu0 %v948
    %1346 = vmatprep.subr.bf16.mxu0 %v945
    %1347 = vmatpush1.bf16.msra.mxu0 %v944
    %1348 = vmatprep.subr.bf16.mxu0 %v941
    %1349 = vmatpush1.bf16.msra.mxu0 %v940
    %1350 = vmatprep.subr.bf16.mxu0 %v937
    %1351 = vmatpush1.bf16.msra.mxu0 %v936
    %1352 = vmatprep.subr.bf16.mxu0 %v997
    %1353 = vmatpush2.bf16.msra.mxu0 %v996
    %1354 = vmatprep.subr.bf16.mxu0 %v993
    %1355 = vmatpush2.bf16.msra.mxu0 %v992
    %1356 = vmatprep.subr.bf16.mxu0 %v989
    %1357 = vmatpush2.bf16.msra.mxu0 %v988
    %1358 = vmatprep.subr.bf16.mxu0 %v985
    %1359 = vmatpush2.bf16.msra.mxu0 %v984
    %1360 = vmatprep.subr.bf16.mxu0 %v981
    %1361 = vmatpush2.bf16.msra.mxu0 %v980
    %1362 = vmatprep.subr.bf16.mxu0 %v977
    %1363 = vmatpush2.bf16.msra.mxu0 %v976
    %1364 = vmatprep.subr.bf16.mxu0 %v973
    %1365 = vmatpush2.bf16.msra.mxu0 %v972
    %1366 = vmatprep.subr.bf16.mxu0 %v969
    %1367 = vmatpush2.bf16.msra.mxu0 %v968
    %1368 = vmatprep.mubr.bf16.mxu0 %v519
    %1369 = vmatmul.mubr.bf16.gmra.mxu0 %v518
    %v1370 = vpop.f32.mrf.mxu0
    %v1371 = vadd.f32 0.0, %v1370
    %v1372 = vpop.f32.mrf.mxu0
    %v1373 = vadd.f32 0.0, %v1372
    %v1374 = vpop.f32.mrf.mxu0
    %v1375 = vadd.f32 0.0, %v1374
    %v1376 = vpop.f32.mrf.mxu0
    %v1377 = vadd.f32 0.0, %v1376
    %1378 = vmatprep.mubr.bf16.mxu0 %v523
    %1379 = vmatmul.mubr.bf16.gmra.mxu0 %v522
    %v1380 = vpop.f32.mrf.mxu0
    %v1381 = vadd.f32 0.0, %v1380
    %v1382 = vpop.f32.mrf.mxu0
    %v1383 = vadd.f32 0.0, %v1382
    %v1384 = vpop.f32.mrf.mxu0
    %v1385 = vadd.f32 0.0, %v1384
    %v1386 = vpop.f32.mrf.mxu0
    %v1387 = vadd.f32 0.0, %v1386
    %1388 = vmatprep.mubr.bf16.mxu0 %v527
    %1389 = vmatmul.mubr.bf16.gmra.mxu0 %v526
    %v1390 = vpop.f32.mrf.mxu0
    %v1391 = vadd.f32 0.0, %v1390
    %v1392 = vpop.f32.mrf.mxu0
    %v1393 = vadd.f32 0.0, %v1392
    %v1394 = vpop.f32.mrf.mxu0
    %v1395 = vadd.f32 0.0, %v1394
    %v1396 = vpop.f32.mrf.mxu0
    %v1397 = vadd.f32 0.0, %v1396
    %1398 = vmatprep.mubr.bf16.mxu0 %v531
    %1399 = vmatmul.mubr.bf16.gmra.mxu0 %v530
    %v1400 = vpop.f32.mrf.mxu0
    %v1401 = vadd.f32 0.0, %v1400
    %v1402 = vpop.f32.mrf.mxu0
    %v1403 = vadd.f32 0.0, %v1402
    %v1404 = vpop.f32.mrf.mxu0
    %v1405 = vadd.f32 0.0, %v1404
    %v1406 = vpop.f32.mrf.mxu0
    %v1407 = vadd.f32 0.0, %v1406
    %1408 = vdwg.mxu0
    %1409 = vmatprep.subr.bf16.mxu0 %v1029
    %1410 = vmatpush1.bf16.msra.mxu0 %v1028
    %1411 = vmatprep.subr.bf16.mxu0 %v1025
    %1412 = vmatpush1.bf16.msra.mxu0 %v1024
    %1413 = vmatprep.subr.bf16.mxu0 %v1021
    %1414 = vmatpush1.bf16.msra.mxu0 %v1020
    %1415 = vmatprep.subr.bf16.mxu0 %v1017
    %1416 = vmatpush1.bf16.msra.mxu0 %v1016
    %1417 = vmatprep.subr.bf16.mxu0 %v1013
    %1418 = vmatpush1.bf16.msra.mxu0 %v1012
    %1419 = vmatprep.subr.bf16.mxu0 %v1009
    %1420 = vmatpush1.bf16.msra.mxu0 %v1008
    %1421 = vmatprep.subr.bf16.mxu0 %v1005
    %1422 = vmatpush1.bf16.msra.mxu0 %v1004
    %1423 = vmatprep.subr.bf16.mxu0 %v1001
    %1424 = vmatpush1.bf16.msra.mxu0 %v1000
    %1425 = vmatprep.subr.bf16.mxu0 %v1061
    %1426 = vmatpush2.bf16.msra.mxu0 %v1060
    %1427 = vmatprep.subr.bf16.mxu0 %v1057
    %1428 = vmatpush2.bf16.msra.mxu0 %v1056
    %1429 = vmatprep.subr.bf16.mxu0 %v1053
    %1430 = vmatpush2.bf16.msra.mxu0 %v1052
    %1431 = vmatprep.subr.bf16.mxu0 %v1049
    %1432 = vmatpush2.bf16.msra.mxu0 %v1048
    %1433 = vmatprep.subr.bf16.mxu0 %v1045
    %1434 = vmatpush2.bf16.msra.mxu0 %v1044
    %1435 = vmatprep.subr.bf16.mxu0 %v1041
    %1436 = vmatpush2.bf16.msra.mxu0 %v1040
    %1437 = vmatprep.subr.bf16.mxu0 %v1037
    %1438 = vmatpush2.bf16.msra.mxu0 %v1036
    %1439 = vmatprep.subr.bf16.mxu0 %v1033
    %1440 = vmatpush2.bf16.msra.mxu0 %v1032
    %1441 = vmatprep.mubr.bf16.mxu0 %v521
    %1442 = vmatmul.mubr.bf16.gmra.mxu0 %v520
    %v1443 = vpop.f32.mrf.mxu0
    %v1444 = vadd.f32 %v1371, %v1443
    %v1445 = vpop.f32.mrf.mxu0
    %v1446 = vadd.f32 %v1373, %v1445
    %v1447 = vpop.f32.mrf.mxu0
    %v1448 = vadd.f32 %v1375, %v1447
    %v1449 = vpop.f32.mrf.mxu0
    %v1450 = vadd.f32 %v1377, %v1449
    %1451 = vmatprep.mubr.bf16.mxu0 %v525
    %1452 = vmatmul.mubr.bf16.gmra.mxu0 %v524
    %v1453 = vpop.f32.mrf.mxu0
    %v1454 = vadd.f32 %v1381, %v1453
    %v1455 = vpop.f32.mrf.mxu0
    %v1456 = vadd.f32 %v1383, %v1455
    %v1457 = vpop.f32.mrf.mxu0
    %v1458 = vadd.f32 %v1385, %v1457
    %v1459 = vpop.f32.mrf.mxu0
    %v1460 = vadd.f32 %v1387, %v1459
    %1461 = vmatprep.mubr.bf16.mxu0 %v529
    %1462 = vmatmul.mubr.bf16.gmra.mxu0 %v528
    %v1463 = vpop.f32.mrf.mxu0
    %v1464 = vadd.f32 %v1391, %v1463
    %v1465 = vpop.f32.mrf.mxu0
    %v1466 = vadd.f32 %v1393, %v1465
    %v1467 = vpop.f32.mrf.mxu0
    %v1468 = vadd.f32 %v1395, %v1467
    %v1469 = vpop.f32.mrf.mxu0
    %v1470 = vadd.f32 %v1397, %v1469
    %1471 = vmatprep.mubr.bf16.mxu0 %v533
    %1472 = vmatmul.mubr.bf16.gmra.mxu0 %v532
    %v1473 = vpop.f32.mrf.mxu0
    %v1474 = vadd.f32 %v1401, %v1473
    %v1475 = vpop.f32.mrf.mxu0
    %v1476 = vadd.f32 %v1403, %v1475
    %v1477 = vpop.f32.mrf.mxu0
    %v1478 = vadd.f32 %v1405, %v1477
    %v1479 = vpop.f32.mrf.mxu0
    %v1480 = vadd.f32 %v1407, %v1479
    %1481 = vdwg.mxu0
    %v1482 = vmul.f32 %v1298, %v318
    %v1483 = vmul.f32 %v1300, %v318
    %v1484 = vmul.f32 %v1444, %v318
    %v1485 = vmul.f32 %v1446, %v318
    %v1486 = vmul.f32 %v1302, %v319
    %v1487 = vmul.f32 %v1304, %v319
    %v1488 = vmul.f32 %v1448, %v319
    %v1489 = vmul.f32 %v1450, %v319
    %v1490 = vmul.f32 %v1308, %v320
    %v1491 = vmul.f32 %v1310, %v320
    %v1492 = vmul.f32 %v1454, %v320
    %v1493 = vmul.f32 %v1456, %v320
    %v1494 = vmul.f32 %v1312, %v321
    %v1495 = vmul.f32 %v1314, %v321
    %v1496 = vmul.f32 %v1458, %v321
    %v1497 = vmul.f32 %v1460, %v321
    %v1498 = vmul.f32 %v1318, %v322
    %v1499 = vmul.f32 %v1320, %v322
    %v1500 = vmul.f32 %v1464, %v322
    %v1501 = vmul.f32 %v1466, %v322
    %v1502 = vmul.f32 %v1322, %v323
    %v1503 = vmul.f32 %v1324, %v323
    %v1504 = vmul.f32 %v1468, %v323
    %v1505 = vmul.f32 %v1470, %v323
    %v1506 = vmul.f32 %v1328, %v324
    %v1507 = vmul.f32 %v1330, %v324
    %v1508 = vmul.f32 %v1474, %v324
    %v1509 = vmul.f32 %v1476, %v324
    %v1510 = vmul.f32 %v1332, %v325
    %v1511 = vmul.f32 %v1334, %v325
    %v1512 = vmul.f32 %v1478, %v325
    %v1513 = vmul.f32 %v1480, %v325
    %v1514 = vpack.c.bf16 %v1486, %v1482
    %v1515 = vpack.c.bf16 %v1487, %v1483
    %v1516 = vpack.c.bf16 %v1488, %v1484
    %v1517 = vpack.c.bf16 %v1489, %v1485
    %v1518 = vpack.c.bf16 %v1494, %v1490
    %v1519 = vpack.c.bf16 %v1495, %v1491
    %v1520 = vpack.c.bf16 %v1496, %v1492
    %v1521 = vpack.c.bf16 %v1497, %v1493
    %v1522 = vpack.c.bf16 %v1502, %v1498
    %v1523 = vpack.c.bf16 %v1503, %v1499
    %v1524 = vpack.c.bf16 %v1504, %v1500
    %v1525 = vpack.c.bf16 %v1505, %v1501
    %v1526 = vpack.c.bf16 %v1510, %v1506
    %v1527 = vpack.c.bf16 %v1511, %v1507
    %v1528 = vpack.c.bf16 %v1512, %v1508
    %v1529 = vpack.c.bf16 %v1513, %v1509
    %v1530 = vpack.c.bf16 %v286, %v285
    %v1531 = vpack.c.bf16 %v288, %v287
    %v1532 = vpack.c.bf16 %v290, %v289
    %v1533 = vpack.c.bf16 %v292, %v291
    %v1535 = vsel %vm293, %v1530, 0
    %v1538 = vsel %vm293, %v1531, 0
    %v1541 = vsel %vm293, %v1532, 0
    %v1544 = vsel %vm293, %v1533, 0
    %1546 = vmatprep.subr.bf16.mxu0 0
    %1547 = vmatpush1.bf16.msra.mxu0 0
    %1548 = vmatprep.subr.bf16.mxu0 0
    %1549 = vmatpush1.bf16.msra.mxu0 0
    %1550 = vmatprep.subr.bf16.mxu0 0
    %1551 = vmatpush1.bf16.msra.mxu0 0
    %1552 = vmatprep.subr.bf16.mxu0 0
    %1553 = vmatpush1.bf16.msra.mxu0 0
    %1554 = vmatprep.subr.bf16.mxu0 %v1527
    %1555 = vmatpush1.bf16.msra.mxu0 %v1526
    %1556 = vmatprep.subr.bf16.mxu0 %v1523
    %1557 = vmatpush1.bf16.msra.mxu0 %v1522
    %1558 = vmatprep.subr.bf16.mxu0 %v1519
    %1559 = vmatpush1.bf16.msra.mxu0 %v1518
    %1560 = vmatprep.subr.bf16.mxu0 %v1515
    %1561 = vmatpush1.bf16.msra.mxu0 %v1514
    %1562 = vmatprep.subr.bf16.mxu0 0
    %1563 = vmatpush2.bf16.msra.mxu0 0
    %1564 = vmatprep.subr.bf16.mxu0 0
    %1565 = vmatpush2.bf16.msra.mxu0 0
    %1566 = vmatprep.subr.bf16.mxu0 0
    %1567 = vmatpush2.bf16.msra.mxu0 0
    %1568 = vmatprep.subr.bf16.mxu0 0
    %1569 = vmatpush2.bf16.msra.mxu0 0
    %1570 = vmatprep.subr.bf16.mxu0 0
    %1571 = vmatpush2.bf16.msra.mxu0 0
    %1572 = vmatprep.subr.bf16.mxu0 0
    %1573 = vmatpush2.bf16.msra.mxu0 0
    %1574 = vmatprep.subr.bf16.mxu0 0
    %1575 = vmatpush2.bf16.msra.mxu0 0
    %1576 = vmatprep.subr.bf16.mxu0 0
    %1577 = vmatpush2.bf16.msra.mxu0 0
    %1578 = vmatprep.mubr.bf16.mxu0 0
    %1579 = vmatmul.mubr.bf16.gmra.mxu0 %v1535
    %v1580 = vpop.f32.mrf.mxu0
    %v1581 = vadd.f32 0.0, %v1580
    %v1582 = vpop.f32.mrf.mxu0
    %v1583 = vadd.f32 0.0, %v1582
    %v1584 = vpop.f32.mrf.mxu0
    %v1585 = vadd.f32 0.0, %v1584
    %v1586 = vpop.f32.mrf.mxu0
    %v1587 = vadd.f32 0.0, %v1586
    %1588 = vmatprep.mubr.bf16.mxu0 0
    %1589 = vmatmul.mubr.bf16.gmra.mxu0 %v1538
    %v1590 = vpop.f32.mrf.mxu0
    %v1591 = vadd.f32 0.0, %v1590
    %v1592 = vpop.f32.mrf.mxu0
    %v1593 = vadd.f32 0.0, %v1592
    %v1594 = vpop.f32.mrf.mxu0
    %v1595 = vadd.f32 0.0, %v1594
    %v1596 = vpop.f32.mrf.mxu0
    %v1597 = vadd.f32 0.0, %v1596
    %1598 = vmatprep.mubr.bf16.mxu0 0
    %1599 = vmatmul.mubr.bf16.gmra.mxu0 %v1541
    %v1600 = vpop.f32.mrf.mxu0
    %v1601 = vadd.f32 0.0, %v1600
    %v1602 = vpop.f32.mrf.mxu0
    %v1603 = vadd.f32 0.0, %v1602
    %v1604 = vpop.f32.mrf.mxu0
    %v1605 = vadd.f32 0.0, %v1604
    %v1606 = vpop.f32.mrf.mxu0
    %v1607 = vadd.f32 0.0, %v1606
    %1608 = vmatprep.mubr.bf16.mxu0 0
    %1609 = vmatmul.mubr.bf16.gmra.mxu0 %v1544
    %v1610 = vpop.f32.mrf.mxu0
    %v1611 = vadd.f32 0.0, %v1610
    %v1612 = vpop.f32.mrf.mxu0
    %v1613 = vadd.f32 0.0, %v1612
    %v1614 = vpop.f32.mrf.mxu0
    %v1615 = vadd.f32 0.0, %v1614
    %v1616 = vpop.f32.mrf.mxu0
    %v1617 = vadd.f32 0.0, %v1616
    %1618 = vdwg.mxu0
    %1619 = vmatprep.subr.bf16.mxu0 0
    %1620 = vmatpush1.bf16.msra.mxu0 0
    %1621 = vmatprep.subr.bf16.mxu0 0
    %1622 = vmatpush1.bf16.msra.mxu0 0
    %1623 = vmatprep.subr.bf16.mxu0 0
    %1624 = vmatpush1.bf16.msra.mxu0 0
    %1625 = vmatprep.subr.bf16.mxu0 0
    %1626 = vmatpush1.bf16.msra.mxu0 0
    %1627 = vmatprep.subr.bf16.mxu0 %v1529
    %1628 = vmatpush1.bf16.msra.mxu0 %v1528
    %1629 = vmatprep.subr.bf16.mxu0 %v1525
    %1630 = vmatpush1.bf16.msra.mxu0 %v1524
    %1631 = vmatprep.subr.bf16.mxu0 %v1521
    %1632 = vmatpush1.bf16.msra.mxu0 %v1520
    %1633 = vmatprep.subr.bf16.mxu0 %v1517
    %1634 = vmatpush1.bf16.msra.mxu0 %v1516
    %1635 = vmatprep.subr.bf16.mxu0 0
    %1636 = vmatpush2.bf16.msra.mxu0 0
    %1637 = vmatprep.subr.bf16.mxu0 0
    %1638 = vmatpush2.bf16.msra.mxu0 0
    %1639 = vmatprep.subr.bf16.mxu0 0
    %1640 = vmatpush2.bf16.msra.mxu0 0
    %1641 = vmatprep.subr.bf16.mxu0 0
    %1642 = vmatpush2.bf16.msra.mxu0 0
    %1643 = vmatprep.subr.bf16.mxu0 0
    %1644 = vmatpush2.bf16.msra.mxu0 0
    %1645 = vmatprep.subr.bf16.mxu0 0
    %1646 = vmatpush2.bf16.msra.mxu0 0
    %1647 = vmatprep.subr.bf16.mxu0 0
    %1648 = vmatpush2.bf16.msra.mxu0 0
    %1649 = vmatprep.subr.bf16.mxu0 0
    %1650 = vmatpush2.bf16.msra.mxu0 0
    %1651 = vmatprep.mubr.bf16.mxu0 0
    %1652 = vmatmul.mubr.bf16.gmra.mxu0 %v1535
    %v1653 = vpop.f32.mrf.mxu0
    %v1654 = vadd.f32 0.0, %v1653
    %v1655 = vpop.f32.mrf.mxu0
    %v1656 = vadd.f32 0.0, %v1655
    %v1657 = vpop.f32.mrf.mxu0
    %v1658 = vadd.f32 0.0, %v1657
    %v1659 = vpop.f32.mrf.mxu0
    %v1660 = vadd.f32 0.0, %v1659
    %1661 = vmatprep.mubr.bf16.mxu0 0
    %1662 = vmatmul.mubr.bf16.gmra.mxu0 %v1538
    %v1663 = vpop.f32.mrf.mxu0
    %v1664 = vadd.f32 0.0, %v1663
    %v1665 = vpop.f32.mrf.mxu0
    %v1666 = vadd.f32 0.0, %v1665
    %v1667 = vpop.f32.mrf.mxu0
    %v1668 = vadd.f32 0.0, %v1667
    %v1669 = vpop.f32.mrf.mxu0
    %v1670 = vadd.f32 0.0, %v1669
    %1671 = vmatprep.mubr.bf16.mxu0 0
    %1672 = vmatmul.mubr.bf16.gmra.mxu0 %v1541
    %v1673 = vpop.f32.mrf.mxu0
    %v1674 = vadd.f32 0.0, %v1673
    %v1675 = vpop.f32.mrf.mxu0
    %v1676 = vadd.f32 0.0, %v1675
    %v1677 = vpop.f32.mrf.mxu0
    %v1678 = vadd.f32 0.0, %v1677
    %v1679 = vpop.f32.mrf.mxu0
    %v1680 = vadd.f32 0.0, %v1679
    %1681 = vmatprep.mubr.bf16.mxu0 0
    %1682 = vmatmul.mubr.bf16.gmra.mxu0 %v1544
    %v1683 = vpop.f32.mrf.mxu0
    %v1684 = vadd.f32 0.0, %v1683
    %v1685 = vpop.f32.mrf.mxu0
    %v1686 = vadd.f32 0.0, %v1685
    %v1687 = vpop.f32.mrf.mxu0
    %v1688 = vadd.f32 0.0, %v1687
    %v1689 = vpop.f32.mrf.mxu0
    %v1690 = vadd.f32 0.0, %v1689
    %1691 = vdwg.mxu0
    %v1692 = vmul.f32 %v1581, %v318
    %v1693 = vmul.f32 %v1583, %v318
    %v1694 = vmul.f32 %v1654, %v318
    %v1695 = vmul.f32 %v1656, %v318
    %v1696 = vmul.f32 %v1585, %v319
    %v1697 = vmul.f32 %v1587, %v319
    %v1698 = vmul.f32 %v1658, %v319
    %v1699 = vmul.f32 %v1660, %v319
    %v1700 = vmul.f32 %v1591, %v320
    %v1701 = vmul.f32 %v1593, %v320
    %v1702 = vmul.f32 %v1664, %v320
    %v1703 = vmul.f32 %v1666, %v320
    %v1704 = vmul.f32 %v1595, %v321
    %v1705 = vmul.f32 %v1597, %v321
    %v1706 = vmul.f32 %v1668, %v321
    %v1707 = vmul.f32 %v1670, %v321
    %v1708 = vmul.f32 %v1601, %v322
    %v1709 = vmul.f32 %v1603, %v322
    %v1710 = vmul.f32 %v1674, %v322
    %v1711 = vmul.f32 %v1676, %v322
    %v1712 = vmul.f32 %v1605, %v323
    %v1713 = vmul.f32 %v1607, %v323
    %v1714 = vmul.f32 %v1678, %v323
    %v1715 = vmul.f32 %v1680, %v323
    %v1716 = vmul.f32 %v1611, %v324
    %v1717 = vmul.f32 %v1613, %v324
    %v1718 = vmul.f32 %v1684, %v324
    %v1719 = vmul.f32 %v1686, %v324
    %v1720 = vmul.f32 %v1615, %v325
    %v1721 = vmul.f32 %v1617, %v325
    %v1722 = vmul.f32 %v1688, %v325
    %v1723 = vmul.f32 %v1690, %v325
    %v1724 = vld [vmem:[%s4] sm:$0xf]
    %v1726 = vlaneseq
    %v1727 = vshrl.u32 %v1726, 7
    %v1728 = vsub.s32 0, %v1727
    %v1729 = vrot.slane %v1724, %v1728
    %v1730 = vlaneseq
    %v1731 = vshrl.u32 %v1730, 7
    %v1732 = vsub.s32 1, %v1731
    %v1733 = vrot.slane %v1724, %v1732
    %v1734 = vlaneseq
    %v1735 = vshrl.u32 %v1734, 7
    %v1736 = vsub.s32 2, %v1735
    %v1737 = vrot.slane %v1724, %v1736
    %v1738 = vlaneseq
    %v1739 = vshrl.u32 %v1738, 7
    %v1740 = vsub.s32 3, %v1739
    %v1741 = vrot.slane %v1724, %v1740
    %v1746 = vadd.f32 %v1692, %v1729
    %v1747 = vadd.f32 %v1693, %v1733
    %v1748 = vadd.f32 %v1694, %v1737
    %v1749 = vadd.f32 %v1695, %v1741
    %v1750 = vadd.f32 %v1696, %v1729
    %v1751 = vadd.f32 %v1697, %v1733
    %v1752 = vadd.f32 %v1698, %v1737
    %v1753 = vadd.f32 %v1699, %v1741
    %v1754 = vadd.f32 %v1700, %v1729
    %v1755 = vadd.f32 %v1701, %v1733
    %v1756 = vadd.f32 %v1702, %v1737
    %v1757 = vadd.f32 %v1703, %v1741
    %v1758 = vadd.f32 %v1704, %v1729
    %v1759 = vadd.f32 %v1705, %v1733
    %v1760 = vadd.f32 %v1706, %v1737
    %v1761 = vadd.f32 %v1707, %v1741
    %v1762 = vadd.f32 %v1708, %v1729
    %v1763 = vadd.f32 %v1709, %v1733
    %v1764 = vadd.f32 %v1710, %v1737
    %v1765 = vadd.f32 %v1711, %v1741
    %v1766 = vadd.f32 %v1712, %v1729
    %v1767 = vadd.f32 %v1713, %v1733
    %v1768 = vadd.f32 %v1714, %v1737
    %v1769 = vadd.f32 %v1715, %v1741
    %v1770 = vadd.f32 %v1716, %v1729
    %v1771 = vadd.f32 %v1717, %v1733
    %v1772 = vadd.f32 %v1718, %v1737
    %v1773 = vadd.f32 %v1719, %v1741
    %v1774 = vadd.f32 %v1720, %v1729
    %v1775 = vadd.f32 %v1721, %v1733
    %v1776 = vadd.f32 %v1722, %v1737
    %v1777 = vadd.f32 %v1723, %v1741
    %1778 = vst [vmem:[#allocation7] sm:$0xff] %v1746
    %1779 = vst [vmem:[#allocation7 + $0x8] sm:$0xff] %v1747
    %1780 = vst [vmem:[#allocation7 + $0x10] sm:$0xff] %v1748
    %1781 = vst [vmem:[#allocation7 + $0x18] sm:$0xff] %v1749
    %1782 = vst [vmem:[#allocation7 + $0x20] sm:$0xff] %v1750
    %1783 = vst [vmem:[#allocation7 + $0x28] sm:$0xff] %v1751
    %1784 = vst [vmem:[#allocation7 + $0x30] sm:$0xff] %v1752
    %1785 = vst [vmem:[#allocation7 + $0x38] sm:$0xff] %v1753
    %1786 = vst [vmem:[#allocation7 + $0x40] sm:$0xff] %v1754
    %1787 = vst [vmem:[#allocation7 + $0x48] sm:$0xff] %v1755
    %1788 = vst [vmem:[#allocation7 + $0x50] sm:$0xff] %v1756
    %1789 = vst [vmem:[#allocation7 + $0x58] sm:$0xff] %v1757
    %1790 = vst [vmem:[#allocation7 + $0x60] sm:$0xff] %v1758
    %1791 = vst [vmem:[#allocation7 + $0x68] sm:$0xff] %v1759
    %1792 = vst [vmem:[#allocation7 + $0x70] sm:$0xff] %v1760
    %1793 = vst [vmem:[#allocation7 + $0x78] sm:$0xff] %v1761
    %1794 = vst [vmem:[#allocation7 + $0x80] sm:$0xff] %v1762
    %1795 = vst [vmem:[#allocation7 + $0x88] sm:$0xff] %v1763
    %1796 = vst [vmem:[#allocation7 + $0x90] sm:$0xff] %v1764
    %1797 = vst [vmem:[#allocation7 + $0x98] sm:$0xff] %v1765
    %1798 = vst [vmem:[#allocation7 + $0xa0] sm:$0xff] %v1766
    %1799 = vst [vmem:[#allocation7 + $0xa8] sm:$0xff] %v1767
    %1800 = vst [vmem:[#allocation7 + $0xb0] sm:$0xff] %v1768
    %1801 = vst [vmem:[#allocation7 + $0xb8] sm:$0xff] %v1769
    %1802 = vst [vmem:[#allocation7 + $0xc0] sm:$0xff] %v1770
    %1803 = vst [vmem:[#allocation7 + $0xc8] sm:$0xff] %v1771
    %1804 = vst [vmem:[#allocation7 + $0xd0] sm:$0xff] %v1772
    %1805 = vst [vmem:[#allocation7 + $0xd8] sm:$0xff] %v1773
    %1806 = vst [vmem:[#allocation7 + $0xe0] sm:$0xff] %v1774
    %1807 = vst [vmem:[#allocation7 + $0xe8] sm:$0xff] %v1775
    %1808 = vst [vmem:[#allocation7 + $0xf0] sm:$0xff] %v1776
    %1809 = vst [vmem:[#allocation7 + $0xf8] sm:$0xff] %v1777
    // Predicated region
    $region30: #{tpu_custom_call.1} parent=1 // pred_check
      _
    $region31: #{tpu_custom_call.1} parent=1 // pred_check_branch
      %1811 = sbr.rel (0) target = $region33
    $region32: #{tpu_custom_call.1} parent=1 // pred_region
      %s1813 = ssub.s32 4096, 4096
      %1814 = vsyncadd [#allocation4], %s1813
      %s1815 = sshll.u32 [#allocation7], 4
      %s1816 = int_to_ptr.vmem [resolvable:$true] %s1815
      %1821 = dma.vmem_to_hbm [thread:$0]  %s1816, 4096, %s5, [#allocation4], 512, 512, 32
    $region33: #{tpu_custom_call.1} parent=1 // pred_fallthru
      _
    // Predicated region
    $region34: #{tpu_custom_call.1} parent=1 // pred_check
      _
    $region35: #{tpu_custom_call.1} parent=1 // pred_check_branch
      %1823 = sbr.rel (0) target = $region37
    $region36: #{tpu_custom_call.1} parent=1 // pred_region
      %1824 = dma.done [#allocation4], 4096
    $region37: #{tpu_custom_call.1} parent=1 // pred_fallthru
      _
    %1825 = vsyncpa [#allocation3], 1
    %1826 = vsyncpa [#allocation6], 1
    %1827 = vsyncpa [#allocation4], 1

</llo_original>
